<compile_context>
chip_gen: v5e
topology: v5e:2x2
jax: 0.10.0
libtpu: 0.0.40
codegen_flags: <defaults>
</compile_context>

<pallas_src>
import functools

import jax
import jax.numpy as jnp
from jax import lax
from jax.experimental import pallas as pl
from jax.experimental.pallas import tpu as pltpu

LANE = 128
SUBLANE = 8


def _round_up(x, m):
    return (x + m - 1) // m * m


def _pad2d(x, rows, cols):
    return jnp.pad(x, ((0, rows - x.shape[0]), (0, cols - x.shape[1])))


# ----------------------------- Pallas kernel ------------------------------- #
def atomgc_kernel(src_ref, dst_ref, bf_ref, af_ref,
                  we_s_ref, we_b_ref, we_d_ref, be_ref,
                  wa_ref, ba_ref, wn_a_ref, wn_g_ref, bn_ref,
                  uaf_ref, ubf_ref, agg_ref):
    step = pl.program_id(0)

    @pl.when(step == 0)
    def _init():
        agg_ref[...] = jnp.zeros_like(agg_ref)

    af = af_ref[...]                                   # (Np, Dap) bf16, resident
    bf = bf_ref[...]                                   # (tE, Dbp) bf16 edge tile
    n_p = af.shape[0]
    t_e = bf.shape[0]

    # Per-tile one-hot incidence (Np, tE) built in VMEM from the int32 index
    # tiles -- no O(E*N) matrices ever touch HBM.  Out-of-range (padding)
    # indices produce all-zero columns and thus contribute nothing.
    atom_iota = lax.broadcasted_iota(jnp.int32, (n_p, t_e), 0)
    s_oh = (atom_iota == src_ref[...]).astype(jnp.bfloat16)   # (Np, tE)
    t_oh = (atom_iota == dst_ref[...]).astype(jnp.bfloat16)   # (Np, tE)

    # Gather endpoint features: contract over the atom axis directly
    # (no .T / transposed VMEM copy).
    cdims = (((0,), (0,)), ((), ()))
    src = lax.dot_general(s_oh, af, cdims, preferred_element_type=jnp.float32)
    dst = lax.dot_general(t_oh, af, cdims, preferred_element_type=jnp.float32)

    # edge_model: ReLU([src ; bf ; dst] @ W_e + b_e); concat folded into 3
    # lane-dense K=128 blocks (bf16 operands, f32 accumulation).
    pre_e = (jnp.dot(src.astype(jnp.bfloat16), we_s_ref[...],
                     preferred_element_type=jnp.float32)
             + jnp.dot(bf, we_b_ref[...], preferred_element_type=jnp.float32)
             + jnp.dot(dst.astype(jnp.bfloat16), we_d_ref[...],
                       preferred_element_type=jnp.float32)
             + be_ref[...])
    m = jnp.maximum(pre_e, 0.0)                        # (tE, Hep) f32 == ubf tile

    # attn_model: sigmoid gate via VPU multiply + lane reduce (avoids a
    # wasteful MXU matmul with a 1-wide output).
    logits = jnp.sum(m * wa_ref[...], axis=-1, keepdims=True) + ba_ref[...]
    msg = jax.nn.sigmoid(logits) * m                   # (tE, Hep) f32

    # 'sum' aggregation to destination atoms: agg += T_oh @ msg (plain matmul).
    agg_ref[...] += jnp.dot(t_oh, msg.astype(jnp.bfloat16),
                            preferred_element_type=jnp.float32)

    ubf_ref[...] = m.astype(ubf_ref.dtype)

    # node_model runs once, after all edge tiles have been accumulated.
    @pl.when(step == pl.num_programs(0) - 1)
    def _finalize():
        pre_n = (jnp.dot(af, wn_a_ref[...], preferred_element_type=jnp.float32)
                 + jnp.dot(agg_ref[...].astype(jnp.bfloat16), wn_g_ref[...],
                           preferred_element_type=jnp.float32)
                 + bn_ref[...])
        uaf_ref[...] = jnp.maximum(pre_n, 0.0).astype(uaf_ref.dtype)


# ------------------------------- wrapper ------------------------------------ #
def atomgc_forward(af, bf, src_idx, dst_idx, params, *, tile_e=128):
    N, Da = af.shape
    E, Db = bf.shape
    He = params["be"].shape[-1]
    Dn = params["bn"].shape[-1]

    Np = _round_up(N, SUBLANE)
    Dap = _round_up(Da, LANE)
    Dbp = _round_up(Db, LANE)
    Hep = _round_up(He, LANE)
    Dnp = _round_up(Dn, LANE)
    Ep = _round_up(E, tile_e)
    n_tiles = Ep // tile_e

    f32, bf16 = jnp.float32, jnp.bfloat16

    # bf16 MXU operands (zero-padded to 128 lanes); biases stay f32 (added
    # post-accumulation on the VPU).
    af_p = _pad2d(af, Np, Dap).astype(bf16)
    bf_p = _pad2d(bf, Ep, Dbp).astype(bf16)

    # Padded edges point at an out-of-range atom id -> zero one-hot column.
    pad_id = jnp.int32(Np)
    src2d = jnp.full((1, Ep), pad_id, jnp.int32).at[0, :E].set(
        src_idx.astype(jnp.int32))
    dst2d = jnp.full((1, Ep), pad_id, jnp.int32).at[0, :E].set(
        dst_idx.astype(jnp.int32))

    we_s = _pad2d(params["we_s"], Dap, Hep).astype(bf16)
    we_b = _pad2d(params["we_b"], Dbp, Hep).astype(bf16)
    we_d = _pad2d(params["we_d"], Dap, Hep).astype(bf16)
    be = _pad2d(params["be"], 1, Hep).astype(f32)
    wa = _pad2d(params["wa"].T, 1, Hep).astype(f32)    # (He,1) -> lane-dense row
    ba = params["ba"].reshape(1, 1).astype(f32)
    wn_a = _pad2d(params["wn_a"], Dap, Dnp).astype(bf16)
    wn_g = _pad2d(params["wn_g"], Hep, Dnp).astype(bf16)
    bn = _pad2d(params["bn"], 1, Dnp).astype(f32)

    resident = lambda i: (0, 0)     # weights / atom features / uaf stay put
    edge_row = lambda i: (i, 0)     # edge-tiled streams
    edge_lane = lambda i: (0, i)    # (1, Ep) index streams

    in_specs = [
        pl.BlockSpec((1, tile_e), edge_lane),     # src ids
        pl.BlockSpec((1, tile_e), edge_lane),     # dst ids
        pl.BlockSpec((tile_e, Dbp), edge_row),    # bond features
        pl.BlockSpec((Np, Dap), resident),        # atom features (VMEM resident)
        pl.BlockSpec((Dap, Hep), resident),       # we_s
        pl.BlockSpec((Dbp, Hep), resident),       # we_b
        pl.BlockSpec((Dap, Hep), resident),       # we_d
        pl.BlockSpec((1, Hep), resident),         # be
        pl.BlockSpec((1, Hep), resident),         # wa (row)
        pl.BlockSpec((1, 1), resident),           # ba
        pl.BlockSpec((Dap, Dnp), resident),       # wn_a
        pl.BlockSpec((Hep, Dnp), resident),       # wn_g
        pl.BlockSpec((1, Dnp), resident),         # bn
    ]
    out_specs = (
        pl.BlockSpec((Np, Dnp), resident),        # uaf (written at last step)
        pl.BlockSpec((tile_e, Hep), edge_row),    # ubf (per edge tile)
    )

    flops = int(
        2 * 2 * Ep * Np * Dap                      # one-hot gathers
        + 2 * Ep * (2 * Dap + Dbp) * Hep           # edge MLP
        + 4 * Ep * Hep                             # gate mul/reduce/scale
        + 2 * Ep * Np * Hep                        # scatter-sum
        + 2 * Np * (Dap + Hep) * Dnp               # node MLP
    )
    bytes_accessed = int(
        sum(int(x.size) * x.dtype.itemsize for x in
            (af_p, bf_p, src2d, dst2d, we_s, we_b, we_d, be, wa, ba,
             wn_a, wn_g, bn))
        + Np * Dnp * 4 + Ep * Hep * 4)

    uaf_p, ubf_p = pl.pallas_call(
        atomgc_kernel,
        out_shape=(jax.ShapeDtypeStruct((Np, Dnp), f32),
                   jax.ShapeDtypeStruct((Ep, Hep), f32)),
        grid_spec=pltpu.PrefetchScalarGridSpec(
            num_scalar_prefetch=0,
            grid=(n_tiles,),
            in_specs=in_specs,
            out_specs=out_specs,
            scratch_shapes=[pltpu.VMEM((Np, Hep), f32)],   # agg accumulator
        ),
        compiler_params=pltpu.CompilerParams(
            dimension_semantics=("arbitrary",),            # agg carried across E
            vmem_limit_bytes=32 * 1024 * 1024,
        ),
        cost_estimate=pl.CostEstimate(flops=flops,
                                      transcendentals=int(Ep),
                                      bytes_accessed=bytes_accessed),
    )(src2d, dst2d, bf_p, af_p, we_s, we_b, we_d, be, wa, ba, wn_a, wn_g, bn)

    return uaf_p[:N, :Dn], ubf_p[:E, :He]


# ---------------------------- pure-JAX reference ---------------------------- #
def atomgc_reference(af, bf, src_idx, dst_idx, params):
    src = af[src_idx]
    dst = af[dst_idx]
    m = jnp.maximum(
        src @ params["we_s"] + bf @ params["we_b"] + dst @ params["we_d"]
        + params["be"], 0.0)
    a = jax.nn.sigmoid(m @ params["wa"] + params["ba"])
    msg = a * m
    agg = jnp.zeros((af.shape[0], m.shape[-1]), jnp.float32).at[dst_idx].add(msg)
    uaf = jnp.maximum(
        af @ params["wn_a"] + agg @ params["wn_g"] + params["bn"], 0.0)
    return uaf, m


# --------------------------------- main ------------------------------------- #
if __name__ == "__main__":
    N, E = 64, 500         # atoms, bonds (directed edges); E not tile-aligned
    Da, Db = 32, 16        # atom / bond feature dims
    He, Dn = 32, 32        # edge-hidden / node-output dims

    key = jax.random.PRNGKey(0)
    k = jax.random.split(key, 12)

    af = jax.random.normal(k[0], (N, Da), jnp.float32)
    bf = jax.random.normal(k[1], (E, Db), jnp.float32)
    src_idx = jax.random.randint(k[2], (E,), 0, N)
    dst_idx = jax.random.randint(k[3], (E,), 0, N)

    def init(kk, shape, fan_in):
        return jax.random.normal(kk, shape, jnp.float32) / jnp.sqrt(fan_in)

    params = {
        "we_s": init(k[4], (Da, He), 2 * Da + Db),
        "we_b": init(k[5], (Db, He), 2 * Da + Db),
        "we_d": init(k[6], (Da, He), 2 * Da + Db),
        "be":   jnp.zeros((1, He), jnp.float32),
        "wa":   init(k[7], (He, 1), He),
        "ba":   jnp.zeros((1, 1), jnp.float32),
        "wn_a": init(k[8], (Da, Dn), Da + He),
        "wn_g": init(k[9], (He, Dn), Da + He),
        "bn":   jnp.zeros((1, Dn), jnp.float32),
    }

    fwd = jax.jit(functools.partial(atomgc_forward, tile_e=128))
    uaf, ubf = fwd(af, bf, src_idx, dst_idx, params)
    jax.block_until_ready((uaf, ubf))

    ref_uaf, ref_ubf = atomgc_reference(af, bf, src_idx, dst_idx, params)
    # bf16 MXU operands with f32 accumulation -> loosen tolerance vs pure-f32 ref
    assert jnp.allclose(uaf, ref_uaf, atol=5e-2, rtol=5e-2), float(
        jnp.max(jnp.abs(uaf - ref_uaf)))
    assert jnp.allclose(ubf, ref_ubf, atol=5e-2, rtol=5e-2), float(
        jnp.max(jnp.abs(ubf - ref_ubf)))

    print("KERNEL_OK")
</pallas_src>

<mosaic_0001>
module attributes {stable_mosaic.version = 11 : i64} {
  func.func @atomgc_kernel(%arg0: i32, %arg1: memref<1x128xi32, #tpu.memory_space<vmem>>, %arg2: memref<1x128xi32, #tpu.memory_space<vmem>>, %arg3: memref<128x128xbf16, #tpu.memory_space<vmem>>, %arg4: memref<64x128xbf16, #tpu.memory_space<vmem>>, %arg5: memref<128x128xbf16, #tpu.memory_space<vmem>>, %arg6: memref<128x128xbf16, #tpu.memory_space<vmem>>, %arg7: memref<128x128xbf16, #tpu.memory_space<vmem>>, %arg8: memref<1x128xf32, #tpu.memory_space<vmem>>, %arg9: memref<1x128xf32, #tpu.memory_space<vmem>>, %arg10: memref<1x1xf32, #tpu.memory_space<vmem>>, %arg11: memref<128x128xbf16, #tpu.memory_space<vmem>>, %arg12: memref<128x128xbf16, #tpu.memory_space<vmem>>, %arg13: memref<1x128xf32, #tpu.memory_space<vmem>>, %arg14: memref<64x128xf32, #tpu.memory_space<vmem>>, %arg15: memref<128x128xf32, #tpu.memory_space<vmem>>, %arg16: memref<64x128xf32, #tpu.memory_space<vmem>>) attributes {dimension_semantics = [#tpu.dimension_semantics<arbitrary>], iteration_bounds = array<i64: 4>, scalar_prefetch = 0 : i64, scratch_operands = 1 : i64, tpu.core_type = #tpu.core_type<tc>, window_params = [{transform_indices = @transform_0, window_bounds = array<i64: 1, 128>}, {transform_indices = @transform_1, window_bounds = array<i64: 1, 128>}, {transform_indices = @transform_2, window_bounds = array<i64: 128, 128>}, {pipeline_mode = #tpu.pipeline_mode<synchronous>, transform_indices = @transform_3, window_bounds = array<i64: 64, 128>}, {pipeline_mode = #tpu.pipeline_mode<synchronous>, transform_indices = @transform_4, window_bounds = array<i64: 128, 128>}, {pipeline_mode = #tpu.pipeline_mode<synchronous>, transform_indices = @transform_5, window_bounds = array<i64: 128, 128>}, {pipeline_mode = #tpu.pipeline_mode<synchronous>, transform_indices = @transform_6, window_bounds = array<i64: 128, 128>}, {pipeline_mode = #tpu.pipeline_mode<synchronous>, transform_indices = @transform_7, window_bounds = array<i64: 1, 128>}, {pipeline_mode = #tpu.pipeline_mode<synchronous>, transform_indices = @transform_8, window_bounds = array<i64: 1, 128>}, {pipeline_mode = #tpu.pipeline_mode<synchronous>, transform_indices = @transform_9, window_bounds = array<i64: 1, 1>}, {pipeline_mode = #tpu.pipeline_mode<synchronous>, transform_indices = @transform_10, window_bounds = array<i64: 128, 128>}, {pipeline_mode = #tpu.pipeline_mode<synchronous>, transform_indices = @transform_11, window_bounds = array<i64: 128, 128>}, {pipeline_mode = #tpu.pipeline_mode<synchronous>, transform_indices = @transform_12, window_bounds = array<i64: 1, 128>}, {pipeline_mode = #tpu.pipeline_mode<synchronous>, transform_indices = @transform_13, window_bounds = array<i64: 64, 128>}, {transform_indices = @transform_14, window_bounds = array<i64: 128, 128>}]} {
    %c0_i32 = arith.constant 0 : i32
    %0 = arith.cmpi eq, %arg0, %c0_i32 : i32
    %1 = arith.extui %0 : i1 to i32
    %c0_i32_0 = arith.constant 0 : i32
    %2 = arith.cmpi ne, %1, %c0_i32_0 : i32
    scf.if %2 {
      %cst_35 = arith.constant 0.000000e+00 : f32
      %59 = vector.broadcast %cst_35 : f32 to vector<64x128xf32>
      %c0_36 = arith.constant 0 : index
      %c0_37 = arith.constant 0 : index
      %60 = vector.load %arg16[%c0_36, %c0_37] : memref<64x128xf32, #tpu.memory_space<vmem>>, vector<64x128xf32>
      tpu.vector_store %arg16[%c0_36, %c0_37], %59 {strides = array<i32>} : memref<64x128xf32, #tpu.memory_space<vmem>>, vector<64x128xf32>,
    } else {
    }
    %c0 = arith.constant 0 : index
    %c0_1 = arith.constant 0 : index
    %3 = vector.load %arg4[%c0, %c0_1] : memref<64x128xbf16, #tpu.memory_space<vmem>>, vector<64x128xbf16>
    %c0_2 = arith.constant 0 : index
    %c0_3 = arith.constant 0 : index
    %4 = vector.load %arg3[%c0_2, %c0_3] : memref<128x128xbf16, #tpu.memory_space<vmem>>, vector<128x128xbf16>
    %5 = tpu.iota {dimensions = array<i32: 0>} : vector<64x128xi32>
    %c0_4 = arith.constant 0 : index
    %c0_5 = arith.constant 0 : index
    %6 = vector.load %arg1[%c0_4, %c0_5] : memref<1x128xi32, #tpu.memory_space<vmem>>, vector<1x128xi32>
    %7 = vector.broadcast %6 : vector<1x128xi32> to vector<64x128xi32>
    %8 = arith.cmpi eq, %5, %7 : vector<64x128xi32>
    %9 = arith.extui %8 : vector<64x128xi1> to vector<64x128xi32>
    %10 = arith.sitofp %9 : vector<64x128xi32> to vector<64x128xf32>
    %11 = arith.truncf %10 : vector<64x128xf32> to vector<64x128xbf16>
    %c0_6 = arith.constant 0 : index
    %c0_7 = arith.constant 0 : index
    %12 = vector.load %arg2[%c0_6, %c0_7] : memref<1x128xi32, #tpu.memory_space<vmem>>, vector<1x128xi32>
    %13 = vector.broadcast %12 : vector<1x128xi32> to vector<64x128xi32>
    %14 = arith.cmpi eq, %5, %13 : vector<64x128xi32>
    %15 = arith.extui %14 : vector<64x128xi1> to vector<64x128xi32>
    %16 = arith.sitofp %15 : vector<64x128xi32> to vector<64x128xf32>
    %17 = arith.truncf %16 : vector<64x128xf32> to vector<64x128xbf16>
    %cst = arith.constant dense<0.000000e+00> : vector<128x128xf32>
    %18 = tpu.matmul %11, %3, %cst {dimension_numbers = #tpu.dot_dimension_numbers<[0], [0], [1], [1], [0, 1, 1, 1], [], []>} : vector<64x128xbf16>, vector<64x128xbf16>, vector<128x128xf32> -> vector<128x128xf32>
    %cst_8 = arith.constant dense<0.000000e+00> : vector<128x128xf32>
    %19 = tpu.matmul %17, %3, %cst_8 {dimension_numbers = #tpu.dot_dimension_numbers<[0], [0], [1], [1], [0, 1, 1, 1], [], []>} : vector<64x128xbf16>, vector<64x128xbf16>, vector<128x128xf32> -> vector<128x128xf32>
    %20 = arith.truncf %18 : vector<128x128xf32> to vector<128x128xbf16>
    %c0_9 = arith.constant 0 : index
    %c0_10 = arith.constant 0 : index
    %21 = vector.load %arg5[%c0_9, %c0_10] : memref<128x128xbf16, #tpu.memory_space<vmem>>, vector<128x128xbf16>
    %cst_11 = arith.constant dense<0.000000e+00> : vector<128x128xf32>
    %22 = tpu.matmul %20, %21, %cst_11 {dimension_numbers = #tpu.dot_dimension_numbers<[1], [0], [0], [1], [0, 0, 1, 1], [], []>} : vector<128x128xbf16>, vector<128x128xbf16>, vector<128x128xf32> -> vector<128x128xf32>
    %c0_12 = arith.constant 0 : index
    %c0_13 = arith.constant 0 : index
    %23 = vector.load %arg6[%c0_12, %c0_13] : memref<128x128xbf16, #tpu.memory_space<vmem>>, vector<128x128xbf16>
    %cst_14 = arith.constant dense<0.000000e+00> : vector<128x128xf32>
    %24 = tpu.matmul %4, %23, %cst_14 {dimension_numbers = #tpu.dot_dimension_numbers<[1], [0], [0], [1], [0, 0, 1, 1], [], []>} : vector<128x128xbf16>, vector<128x128xbf16>, vector<128x128xf32> -> vector<128x128xf32>
    %25 = arith.addf %22, %24 : vector<128x128xf32>
    %26 = arith.truncf %19 : vector<128x128xf32> to vector<128x128xbf16>
    %c0_15 = arith.constant 0 : index
    %c0_16 = arith.constant 0 : index
    %27 = vector.load %arg7[%c0_15, %c0_16] : memref<128x128xbf16, #tpu.memory_space<vmem>>, vector<128x128xbf16>
    %cst_17 = arith.constant dense<0.000000e+00> : vector<128x128xf32>
    %28 = tpu.matmul %26, %27, %cst_17 {dimension_numbers = #tpu.dot_dimension_numbers<[1], [0], [0], [1], [0, 0, 1, 1], [], []>} : vector<128x128xbf16>, vector<128x128xbf16>, vector<128x128xf32> -> vector<128x128xf32>
    %29 = arith.addf %25, %28 : vector<128x128xf32>
    %c0_18 = arith.constant 0 : index
    %c0_19 = arith.constant 0 : index
    %30 = vector.load %arg8[%c0_18, %c0_19] : memref<1x128xf32, #tpu.memory_space<vmem>>, vector<1x128xf32>
    %31 = vector.broadcast %30 : vector<1x128xf32> to vector<128x128xf32>
    %32 = arith.addf %29, %31 : vector<128x128xf32>
    %cst_20 = arith.constant 0.000000e+00 : f32
    %33 = vector.broadcast %cst_20 : f32 to vector<128x128xf32>
    %34 = arith.maximumf %32, %33 : vector<128x128xf32>
    %c0_21 = arith.constant 0 : index
    %c0_22 = arith.constant 0 : index
    %35 = vector.load %arg9[%c0_21, %c0_22] : memref<1x128xf32, #tpu.memory_space<vmem>>, vector<1x128xf32>
    %36 = vector.broadcast %35 : vector<1x128xf32> to vector<128x128xf32>
    %37 = arith.mulf %34, %36 : vector<128x128xf32>
    %cst_23 = arith.constant dense<0.000000e+00> : vector<128xf32>
    %38 = vector.multi_reduction <add>, %37, %cst_23 [1] : vector<128x128xf32> to vector<128xf32>
    %39 = vector.shape_cast %38 : vector<128xf32> to vector<128x1xf32>
    %c0_24 = arith.constant 0 : index
    %c0_25 = arith.constant 0 : index
    %40 = vector.load %arg10[%c0_24, %c0_25] : memref<1x1xf32, #tpu.memory_space<vmem>>, vector<1x1xf32>
    %41 = vector.broadcast %40 : vector<1x1xf32> to vector<128x1xf32>
    %42 = arith.addf %39, %41 : vector<128x1xf32>
    %43 = arith.negf %42 : vector<128x1xf32>
    %44 = math.exp %43 : vector<128x1xf32>
    %cst_26 = arith.constant 1.000000e+00 : f32
    %45 = vector.broadcast %cst_26 : f32 to vector<128x1xf32>
    %46 = arith.addf %45, %44 : vector<128x1xf32>
    %47 = arith.divf %45, %46 : vector<128x1xf32>
    %48 = vector.broadcast %47 : vector<128x1xf32> to vector<128x128xf32>
    %49 = arith.mulf %48, %34 : vector<128x128xf32>
    %c0_27 = arith.constant 0 : index
    %c0_28 = arith.constant 0 : index
    %50 = vector.load %arg16[%c0_27, %c0_28] : memref<64x128xf32, #tpu.memory_space<vmem>>, vector<64x128xf32>
    %51 = arith.truncf %49 : vector<128x128xf32> to vector<128x128xbf16>
    %cst_29 = arith.constant dense<0.000000e+00> : vector<64x128xf32>
    %52 = tpu.matmul %17, %51, %cst_29 {dimension_numbers = #tpu.dot_dimension_numbers<[1], [0], [0], [1], [0, 0, 1, 1], [], []>} : vector<64x128xbf16>, vector<128x128xbf16>, vector<64x128xf32> -> vector<64x128xf32>
    %53 = arith.addf %50, %52 : vector<64x128xf32>
    %c0_30 = arith.constant 0 : index
    %c0_31 = arith.constant 0 : index
    %54 = vector.load %arg16[%c0_30, %c0_31] : memref<64x128xf32, #tpu.memory_space<vmem>>, vector<64x128xf32>
    tpu.vector_store %arg16[%c0_30, %c0_31], %53 {strides = array<i32>} : memref<64x128xf32, #tpu.memory_space<vmem>>, vector<64x128xf32>,
    %c0_32 = arith.constant 0 : index
    %c0_33 = arith.constant 0 : index
    %55 = vector.load %arg15[%c0_32, %c0_33] : memref<128x128xf32, #tpu.memory_space<vmem>>, vector<128x128xf32>
    tpu.vector_store %arg15[%c0_32, %c0_33], %34 {strides = array<i32>} : memref<128x128xf32, #tpu.memory_space<vmem>>, vector<128x128xf32>,
    %c3_i32 = arith.constant 3 : i32
    %56 = arith.cmpi eq, %arg0, %c3_i32 : i32
    %57 = arith.extui %56 : i1 to i32
    %c0_i32_34 = arith.constant 0 : i32
    %58 = arith.cmpi ne, %57, %c0_i32_34 : i32
    scf.if %58 {
      %c0_35 = arith.constant 0 : index
      %c0_36 = arith.constant 0 : index
      %59 = vector.load %arg11[%c0_35, %c0_36] : memref<128x128xbf16, #tpu.memory_space<vmem>>, vector<128x128xbf16>
      %cst_37 = arith.constant dense<0.000000e+00> : vector<64x128xf32>
      %60 = tpu.matmul %3, %59, %cst_37 {dimension_numbers = #tpu.dot_dimension_numbers<[1], [0], [0], [1], [0, 0, 1, 1], [], []>} : vector<64x128xbf16>, vector<128x128xbf16>, vector<64x128xf32> -> vector<64x128xf32>
      %c0_38 = arith.constant 0 : index
      %c0_39 = arith.constant 0 : index
      %61 = vector.load %arg16[%c0_38, %c0_39] : memref<64x128xf32, #tpu.memory_space<vmem>>, vector<64x128xf32>
      %62 = arith.truncf %61 : vector<64x128xf32> to vector<64x128xbf16>
      %c0_40 = arith.constant 0 : index
      %c0_41 = arith.constant 0 : index
      %63 = vector.load %arg12[%c0_40, %c0_41] : memref<128x128xbf16, #tpu.memory_space<vmem>>, vector<128x128xbf16>
      %cst_42 = arith.constant dense<0.000000e+00> : vector<64x128xf32>
      %64 = tpu.matmul %62, %63, %cst_42 {dimension_numbers = #tpu.dot_dimension_numbers<[1], [0], [0], [1], [0, 0, 1, 1], [], []>} : vector<64x128xbf16>, vector<128x128xbf16>, vector<64x128xf32> -> vector<64x128xf32>
      %65 = arith.addf %60, %64 : vector<64x128xf32>
      %c0_43 = arith.constant 0 : index
      %c0_44 = arith.constant 0 : index
      %66 = vector.load %arg13[%c0_43, %c0_44] : memref<1x128xf32, #tpu.memory_space<vmem>>, vector<1x128xf32>
      %67 = vector.broadcast %66 : vector<1x128xf32> to vector<64x128xf32>
      %68 = arith.addf %65, %67 : vector<64x128xf32>
      %cst_45 = arith.constant 0.000000e+00 : f32
      %69 = vector.broadcast %cst_45 : f32 to vector<64x128xf32>
      %70 = arith.maximumf %68, %69 : vector<64x128xf32>
      %c0_46 = arith.constant 0 : index
      %c0_47 = arith.constant 0 : index
      %71 = vector.load %arg14[%c0_46, %c0_47] : memref<64x128xf32, #tpu.memory_space<vmem>>, vector<64x128xf32>
      tpu.vector_store %arg14[%c0_46, %c0_47], %70 {strides = array<i32>} : memref<64x128xf32, #tpu.memory_space<vmem>>, vector<64x128xf32>,
    } else {
    }
    return
  }
  func.func @transform_0(%arg0: i32) -> (i32, i32) {
    %c0_i32 = arith.constant 0 : i32
    %c0_i32_0 = arith.constant 0 : i32
    return %c0_i32, %arg0 : i32, i32
  }
  func.func @transform_1(%arg0: i32) -> (i32, i32) {
    %c0_i32 = arith.constant 0 : i32
    %c0_i32_0 = arith.constant 0 : i32
    return %c0_i32, %arg0 : i32, i32
  }
  func.func @transform_2(%arg0: i32) -> (i32, i32) {
    %c0_i32 = arith.constant 0 : i32
    %c0_i32_0 = arith.constant 0 : i32
    return %arg0, %c0_i32 : i32, i32
  }
  func.func @transform_3(%arg0: i32) -> (i32, i32) {
    %c0_i32 = arith.constant 0 : i32
    %c0_i32_0 = arith.constant 0 : i32
    %c0_i32_1 = arith.constant 0 : i32
    return %c0_i32, %c0_i32_0 : i32, i32
  }
  func.func @transform_4(%arg0: i32) -> (i32, i32) {
    %c0_i32 = arith.constant 0 : i32
    %c0_i32_0 = arith.constant 0 : i32
    %c0_i32_1 = arith.constant 0 : i32
    return %c0_i32, %c0_i32_0 : i32, i32
  }
  func.func @transform_5(%arg0: i32) -> (i32, i32) {
    %c0_i32 = arith.constant 0 : i32
    %c0_i32_0 = arith.constant 0 : i32
    %c0_i32_1 = arith.constant 0 : i32
    return %c0_i32, %c0_i32_0 : i32, i32
  }
  func.func @transform_6(%arg0: i32) -> (i32, i32) {
    %c0_i32 = arith.constant 0 : i32
    %c0_i32_0 = arith.constant 0 : i32
    %c0_i32_1 = arith.constant 0 : i32
    return %c0_i32, %c0_i32_0 : i32, i32
  }
  func.func @transform_7(%arg0: i32) -> (i32, i32) {
    %c0_i32 = arith.constant 0 : i32
    %c0_i32_0 = arith.constant 0 : i32
    %c0_i32_1 = arith.constant 0 : i32
    return %c0_i32, %c0_i32_0 : i32, i32
  }
  func.func @transform_8(%arg0: i32) -> (i32, i32) {
    %c0_i32 = arith.constant 0 : i32
    %c0_i32_0 = arith.constant 0 : i32
    %c0_i32_1 = arith.constant 0 : i32
    return %c0_i32, %c0_i32_0 : i32, i32
  }
  func.func @transform_9(%arg0: i32) -> (i32, i32) {
    %c0_i32 = arith.constant 0 : i32
    %c0_i32_0 = arith.constant 0 : i32
    %c0_i32_1 = arith.constant 0 : i32
    return %c0_i32, %c0_i32_0 : i32, i32
  }
  func.func @transform_10(%arg0: i32) -> (i32, i32) {
    %c0_i32 = arith.constant 0 : i32
    %c0_i32_0 = arith.constant 0 : i32
    %c0_i32_1 = arith.constant 0 : i32
    return %c0_i32, %c0_i32_0 : i32, i32
  }
  func.func @transform_11(%arg0: i32) -> (i32, i32) {
    %c0_i32 = arith.constant 0 : i32
    %c0_i32_0 = arith.constant 0 : i32
    %c0_i32_1 = arith.constant 0 : i32
    return %c0_i32, %c0_i32_0 : i32, i32
  }
  func.func @transform_12(%arg0: i32) -> (i32, i32) {
    %c0_i32 = arith.constant 0 : i32
    %c0_i32_0 = arith.constant 0 : i32
    %c0_i32_1 = arith.constant 0 : i32
    return %c0_i32, %c0_i32_0 : i32, i32
  }
  func.func @transform_13(%arg0: i32) -> (i32, i32) {
    %c0_i32 = arith.constant 0 : i32
    %c0_i32_0 = arith.constant 0 : i32
    %c0_i32_1 = arith.constant 0 : i32
    return %c0_i32, %c0_i32_0 : i32, i32
  }
  func.func @transform_14(%arg0: i32) -> (i32, i32) {
    %c0_i32 = arith.constant 0 : i32
    %c0_i32_0 = arith.constant 0 : i32
    return %arg0, %c0_i32 : i32, i32
  }
}

</mosaic_0001>

<llo_original>
// kernel: atomgc_forward.1
$region0: #{atomgc_forward.1}
  #allocation0 [shape = 'u32[]', space=smem, size = 0x4, offset = 0x4, fixed_abs, tag = 'smem constant byte address 0x4 - core index']
  #allocation1 [shape = 'u32[72,128]{1,0:T(1,128)}', space=vmem, size = 0x9000, scoped, tag = 'internal scratch']
  #allocation2 [shape = 'f32[64,128]{1,0:T(8,128)}', space=vmem, size = 0x8000, scoped, tag = 'scratch operand']
  #allocation3 [shape = 'f32[1,1]{1,0:T(1,128)S(1)}', space=vmem, size = 0x200, scoped, tag = 'scoped memory for atomgc_forward.1']
  %s0 = inlined_call_operand.vmem [shape: s32[1,512], index: 0, kind: input, shape index: {}]
  %s1 = inlined_call_operand.vmem [shape: s32[1,512], index: 1, kind: input, shape index: {}]
  %s2 = inlined_call_operand.vmem [shape: bf16[512,128], index: 2, kind: input, shape index: {}]
  %s3 = inlined_call_operand.vmem [shape: bf16[64,128], index: 3, kind: input, shape index: {}]
  %s4 = inlined_call_operand.vmem [shape: bf16[128,128], index: 4, kind: input, shape index: {}]
  %s5 = inlined_call_operand.vmem [shape: bf16[128,128], index: 5, kind: input, shape index: {}]
  %s6 = inlined_call_operand.vmem [shape: bf16[128,128], index: 6, kind: input, shape index: {}]
  %s7 = inlined_call_operand.vmem [shape: f32[1,128], index: 7, kind: input, shape index: {}]
  %s8 = inlined_call_operand.vmem [shape: f32[1,128], index: 8, kind: input, shape index: {}]
  %s9 = inlined_call_operand.<no memory space> [shape: f32[1,1], index: 9, kind: input, shape index: {}]
  %s10 = inlined_call_operand.vmem [shape: bf16[128,128], index: 10, kind: input, shape index: {}]
  %s11 = inlined_call_operand.vmem [shape: bf16[128,128], index: 11, kind: input, shape index: {}]
  %s12 = inlined_call_operand.vmem [shape: f32[1,128], index: 12, kind: input, shape index: {}]
  %s13 = inlined_call_operand.vmem [shape: f32[64,128], index: 13, kind: output, shape index: {0}]
  %s14 = inlined_call_operand.vmem [shape: f32[512,128], index: 14, kind: output, shape index: {1}]
  %15 = xla_tuple %s13, %s14
  %s16 = sld [smem:[#allocation0]]
  $region101: #{atomgc_forward.1} parent=0
    _
  %s18 = ssub.s32 1, %s16
  %s19 = scalar_select 0, %s18, %s16
  %v20 = vstv %s9
  %21 = vst [vmem:[#allocation3] sm:$0x1] %v20
  loop: start=0, step=1, limit=6
  $region2: #{atomgc_forward.1} parent=0 // loop_pre_header
    _
  $region3: #{atomgc_forward.1} parent=0 // loop_header
    %s23 = sphi 0, %s27
    %p24 = scmp.ge.s32.totalorder %s23, 6
    %s33 = sphi 0, %s35
    %s36 = sphi 0, %s33
    %s37 = sphi 0, %s36
    %s53 = sphi 0, %s37
    %s59 = sphi 0, %s61
    %s62 = sphi 0, %s59
    %s63 = sphi 0, %s62
    %s79 = sphi 0, %s63
    %s85 = sphi 0, %s87
    %s88 = sphi 0, %s85
    %s89 = sphi 0, %s88
    %s105 = sphi 0, %s89
    %s109 = sphi 0, %s109
    %s111 = sphi 0, %s109
    %s112 = sphi 0, %s111
    %s126 = sphi 0, %s112
    %s130 = sphi 0, %s130
    %s132 = sphi 0, %s130
    %s133 = sphi 0, %s132
    %s147 = sphi 0, %s133
    %s151 = sphi 0, %s151
    %s153 = sphi 0, %s151
    %s154 = sphi 0, %s153
    %s168 = sphi 0, %s154
    %s172 = sphi 0, %s172
    %s174 = sphi 0, %s172
    %s175 = sphi 0, %s174
    %s189 = sphi 0, %s175
    %s193 = sphi 0, %s193
    %s195 = sphi 0, %s193
    %s196 = sphi 0, %s195
    %s210 = sphi 0, %s196
    %s214 = sphi 0, %s214
    %s216 = sphi 0, %s214
    %s217 = sphi 0, %s216
    %s231 = sphi 0, %s217
    %s235 = sphi 0, %s235
    %s237 = sphi 0, %s235
    %s238 = sphi 0, %s237
    %s252 = sphi 0, %s238
    %s256 = sphi 0, %s256
    %s258 = sphi 0, %s256
    %s259 = sphi 0, %s258
    %s273 = sphi 0, %s259
    %s277 = sphi 0, %s277
    %s279 = sphi 0, %s277
    %s280 = sphi 0, %s279
    %s294 = sphi 0, %s280
    %s298 = sphi 0, %s298
    %s300 = sphi 0, %s298
    %s301 = sphi 0, %s300
    %s315 = sphi 0, %s301
    %s319 = sphi 0, %s319
    %s321 = sphi 0, %s319
    %s322 = sphi 0, %s321
    %s336 = sphi 0, %s322
    %s342 = sphi 0, %s344
    %s345 = sphi 0, %s342
    %s346 = sphi 0, %s345
    %s362 = sphi 0, %s346
  $region4: #{atomgc_forward.1} parent=0 // loop_header_branch
    %26 = sbr.rel (%p24) target = $region8
  $region5: #{atomgc_forward.1} parent=0 // loop_body
    %s28 = ssub.s32 %s23, 1
    %s29 = ssub.s32 %s23, 2
    %s30 = sadd.s32 %s23, 1
    %s31 = ssub.s32 %s23, %s30
    %p32 = scmp.eq.s32.totalorder %s31, 0
    %s34 = sadd.s32 %s33, 1
    %s35 = scalar_select %p32, %s33, %s34
    %p38 = pneg %p32
    %p39 = scmp.eq.s32.totalorder %s23, 3
    %p40 = por %p38, %p39
    %p41 = scmp.ne.s32.totalorder %s33, %s36
    %p42 = scmp.eq.s32.totalorder %s23, 0
    %p43 = por %p41, %p42
    %p44 = scmp.ne.s32.totalorder %s33, %s36
    %p45 = scmp.eq.s32.totalorder %s28, 3
    %p46 = por %p44, %p45
    %p47 = scmp.ne.s32.totalorder %s36, %s37
    %p48 = scmp.eq.s32.totalorder %s28, 0
    %p49 = por %p47, %p48
    %p50 = scmp.ne.s32.totalorder %s36, %s37
    %p51 = scmp.eq.s32.totalorder %s29, 3
    %p52 = por %p50, %p51
    %p54 = scmp.ne.s32.totalorder %s37, %s53
    %p55 = scmp.eq.s32.totalorder %s29, 0
    %p56 = por %p54, %p55
    %s57 = ssub.s32 %s23, %s30
    %p58 = scmp.eq.s32.totalorder %s57, 0
    %s60 = sadd.s32 %s59, 1
    %s61 = scalar_select %p58, %s59, %s60
    %p64 = pneg %p58
    %p65 = scmp.eq.s32.totalorder %s23, 3
    %p66 = por %p64, %p65
    %p67 = scmp.ne.s32.totalorder %s59, %s62
    %p68 = scmp.eq.s32.totalorder %s23, 0
    %p69 = por %p67, %p68
    %p70 = scmp.ne.s32.totalorder %s59, %s62
    %p71 = scmp.eq.s32.totalorder %s28, 3
    %p72 = por %p70, %p71
    %p73 = scmp.ne.s32.totalorder %s62, %s63
    %p74 = scmp.eq.s32.totalorder %s28, 0
    %p75 = por %p73, %p74
    %p76 = scmp.ne.s32.totalorder %s62, %s63
    %p77 = scmp.eq.s32.totalorder %s29, 3
    %p78 = por %p76, %p77
    %p80 = scmp.ne.s32.totalorder %s63, %s79
    %p81 = scmp.eq.s32.totalorder %s29, 0
    %p82 = por %p80, %p81
    %s83 = ssub.s32 %s23, %s30
    %p84 = scmp.eq.s32.totalorder %s83, 0
    %s86 = sadd.s32 %s85, 1
    %s87 = scalar_select %p84, %s85, %s86
    %p90 = pneg %p84
    %p91 = scmp.eq.s32.totalorder %s23, 3
    %p92 = por %p90, %p91
    %p93 = scmp.ne.s32.totalorder %s85, %s88
    %p94 = scmp.eq.s32.totalorder %s23, 0
    %p95 = por %p93, %p94
    %p96 = scmp.ne.s32.totalorder %s85, %s88
    %p97 = scmp.eq.s32.totalorder %s28, 3
    %p98 = por %p96, %p97
    %p99 = scmp.ne.s32.totalorder %s88, %s89
    %p100 = scmp.eq.s32.totalorder %s28, 0
    %p101 = por %p99, %p100
    %p102 = scmp.ne.s32.totalorder %s88, %s89
    %p103 = scmp.eq.s32.totalorder %s29, 3
    %p104 = por %p102, %p103
    %p106 = scmp.ne.s32.totalorder %s89, %s105
    %p107 = scmp.eq.s32.totalorder %s29, 0
    %p108 = por %p106, %p107
    %s110 = sadd.s32 %s109, 1
    %p113 = scmp.eq.s32.totalorder %s23, 3
    %p114 = scmp.ne.s32.totalorder %s109, %s111
    %p115 = scmp.eq.s32.totalorder %s23, 0
    %p116 = por %p114, %p115
    %p117 = scmp.ne.s32.totalorder %s109, %s111
    %p118 = scmp.eq.s32.totalorder %s28, 3
    %p119 = por %p117, %p118
    %p120 = scmp.ne.s32.totalorder %s111, %s112
    %p121 = scmp.eq.s32.totalorder %s28, 0
    %p122 = por %p120, %p121
    %p123 = scmp.ne.s32.totalorder %s111, %s112
    %p124 = scmp.eq.s32.totalorder %s29, 3
    %p125 = por %p123, %p124
    %p127 = scmp.ne.s32.totalorder %s112, %s126
    %p128 = scmp.eq.s32.totalorder %s29, 0
    %p129 = por %p127, %p128
    %s131 = sadd.s32 %s130, 1
    %p134 = scmp.eq.s32.totalorder %s23, 3
    %p135 = scmp.ne.s32.totalorder %s130, %s132
    %p136 = scmp.eq.s32.totalorder %s23, 0
    %p137 = por %p135, %p136
    %p138 = scmp.ne.s32.totalorder %s130, %s132
    %p139 = scmp.eq.s32.totalorder %s28, 3
    %p140 = por %p138, %p139
    %p141 = scmp.ne.s32.totalorder %s132, %s133
    %p142 = scmp.eq.s32.totalorder %s28, 0
    %p143 = por %p141, %p142
    %p144 = scmp.ne.s32.totalorder %s132, %s133
    %p145 = scmp.eq.s32.totalorder %s29, 3
    %p146 = por %p144, %p145
    %p148 = scmp.ne.s32.totalorder %s133, %s147
    %p149 = scmp.eq.s32.totalorder %s29, 0
    %p150 = por %p148, %p149
    %s152 = sadd.s32 %s151, 1
    %p155 = scmp.eq.s32.totalorder %s23, 3
    %p156 = scmp.ne.s32.totalorder %s151, %s153
    %p157 = scmp.eq.s32.totalorder %s23, 0
    %p158 = por %p156, %p157
    %p159 = scmp.ne.s32.totalorder %s151, %s153
    %p160 = scmp.eq.s32.totalorder %s28, 3
    %p161 = por %p159, %p160
    %p162 = scmp.ne.s32.totalorder %s153, %s154
    %p163 = scmp.eq.s32.totalorder %s28, 0
    %p164 = por %p162, %p163
    %p165 = scmp.ne.s32.totalorder %s153, %s154
    %p166 = scmp.eq.s32.totalorder %s29, 3
    %p167 = por %p165, %p166
    %p169 = scmp.ne.s32.totalorder %s154, %s168
    %p170 = scmp.eq.s32.totalorder %s29, 0
    %p171 = por %p169, %p170
    %s173 = sadd.s32 %s172, 1
    %p176 = scmp.eq.s32.totalorder %s23, 3
    %p177 = scmp.ne.s32.totalorder %s172, %s174
    %p178 = scmp.eq.s32.totalorder %s23, 0
    %p179 = por %p177, %p178
    %p180 = scmp.ne.s32.totalorder %s172, %s174
    %p181 = scmp.eq.s32.totalorder %s28, 3
    %p182 = por %p180, %p181
    %p183 = scmp.ne.s32.totalorder %s174, %s175
    %p184 = scmp.eq.s32.totalorder %s28, 0
    %p185 = por %p183, %p184
    %p186 = scmp.ne.s32.totalorder %s174, %s175
    %p187 = scmp.eq.s32.totalorder %s29, 3
    %p188 = por %p186, %p187
    %p190 = scmp.ne.s32.totalorder %s175, %s189
    %p191 = scmp.eq.s32.totalorder %s29, 0
    %p192 = por %p190, %p191
    %s194 = sadd.s32 %s193, 1
    %p197 = scmp.eq.s32.totalorder %s23, 3
    %p198 = scmp.ne.s32.totalorder %s193, %s195
    %p199 = scmp.eq.s32.totalorder %s23, 0
    %p200 = por %p198, %p199
    %p201 = scmp.ne.s32.totalorder %s193, %s195
    %p202 = scmp.eq.s32.totalorder %s28, 3
    %p203 = por %p201, %p202
    %p204 = scmp.ne.s32.totalorder %s195, %s196
    %p205 = scmp.eq.s32.totalorder %s28, 0
    %p206 = por %p204, %p205
    %p207 = scmp.ne.s32.totalorder %s195, %s196
    %p208 = scmp.eq.s32.totalorder %s29, 3
    %p209 = por %p207, %p208
    %p211 = scmp.ne.s32.totalorder %s196, %s210
    %p212 = scmp.eq.s32.totalorder %s29, 0
    %p213 = por %p211, %p212
    %s215 = sadd.s32 %s214, 1
    %p218 = scmp.eq.s32.totalorder %s23, 3
    %p219 = scmp.ne.s32.totalorder %s214, %s216
    %p220 = scmp.eq.s32.totalorder %s23, 0
    %p221 = por %p219, %p220
    %p222 = scmp.ne.s32.totalorder %s214, %s216
    %p223 = scmp.eq.s32.totalorder %s28, 3
    %p224 = por %p222, %p223
    %p225 = scmp.ne.s32.totalorder %s216, %s217
    %p226 = scmp.eq.s32.totalorder %s28, 0
    %p227 = por %p225, %p226
    %p228 = scmp.ne.s32.totalorder %s216, %s217
    %p229 = scmp.eq.s32.totalorder %s29, 3
    %p230 = por %p228, %p229
    %p232 = scmp.ne.s32.totalorder %s217, %s231
    %p233 = scmp.eq.s32.totalorder %s29, 0
    %p234 = por %p232, %p233
    %s236 = sadd.s32 %s235, 1
    %p239 = scmp.eq.s32.totalorder %s23, 3
    %p240 = scmp.ne.s32.totalorder %s235, %s237
    %p241 = scmp.eq.s32.totalorder %s23, 0
    %p242 = por %p240, %p241
    %p243 = scmp.ne.s32.totalorder %s235, %s237
    %p244 = scmp.eq.s32.totalorder %s28, 3
    %p245 = por %p243, %p244
    %p246 = scmp.ne.s32.totalorder %s237, %s238
    %p247 = scmp.eq.s32.totalorder %s28, 0
    %p248 = por %p246, %p247
    %p249 = scmp.ne.s32.totalorder %s237, %s238
    %p250 = scmp.eq.s32.totalorder %s29, 3
    %p251 = por %p249, %p250
    %p253 = scmp.ne.s32.totalorder %s238, %s252
    %p254 = scmp.eq.s32.totalorder %s29, 0
    %p255 = por %p253, %p254
    %s257 = sadd.s32 %s256, 1
    %p260 = scmp.eq.s32.totalorder %s23, 3
    %p261 = scmp.ne.s32.totalorder %s256, %s258
    %p262 = scmp.eq.s32.totalorder %s23, 0
    %p263 = por %p261, %p262
    %p264 = scmp.ne.s32.totalorder %s256, %s258
    %p265 = scmp.eq.s32.totalorder %s28, 3
    %p266 = por %p264, %p265
    %p267 = scmp.ne.s32.totalorder %s258, %s259
    %p268 = scmp.eq.s32.totalorder %s28, 0
    %p269 = por %p267, %p268
    %p270 = scmp.ne.s32.totalorder %s258, %s259
    %p271 = scmp.eq.s32.totalorder %s29, 3
    %p272 = por %p270, %p271
    %p274 = scmp.ne.s32.totalorder %s259, %s273
    %p275 = scmp.eq.s32.totalorder %s29, 0
    %p276 = por %p274, %p275
    %s278 = sadd.s32 %s277, 1
    %p281 = scmp.eq.s32.totalorder %s23, 3
    %p282 = scmp.ne.s32.totalorder %s277, %s279
    %p283 = scmp.eq.s32.totalorder %s23, 0
    %p284 = por %p282, %p283
    %p285 = scmp.ne.s32.totalorder %s277, %s279
    %p286 = scmp.eq.s32.totalorder %s28, 3
    %p287 = por %p285, %p286
    %p288 = scmp.ne.s32.totalorder %s279, %s280
    %p289 = scmp.eq.s32.totalorder %s28, 0
    %p290 = por %p288, %p289
    %p291 = scmp.ne.s32.totalorder %s279, %s280
    %p292 = scmp.eq.s32.totalorder %s29, 3
    %p293 = por %p291, %p292
    %p295 = scmp.ne.s32.totalorder %s280, %s294
    %p296 = scmp.eq.s32.totalorder %s29, 0
    %p297 = por %p295, %p296
    %s299 = sadd.s32 %s298, 1
    %p302 = scmp.eq.s32.totalorder %s23, 3
    %p303 = scmp.ne.s32.totalorder %s298, %s300
    %p304 = scmp.eq.s32.totalorder %s23, 0
    %p305 = por %p303, %p304
    %p306 = scmp.ne.s32.totalorder %s298, %s300
    %p307 = scmp.eq.s32.totalorder %s28, 3
    %p308 = por %p306, %p307
    %p309 = scmp.ne.s32.totalorder %s300, %s301
    %p310 = scmp.eq.s32.totalorder %s28, 0
    %p311 = por %p309, %p310
    %p312 = scmp.ne.s32.totalorder %s300, %s301
    %p313 = scmp.eq.s32.totalorder %s29, 3
    %p314 = por %p312, %p313
    %p316 = scmp.ne.s32.totalorder %s301, %s315
    %p317 = scmp.eq.s32.totalorder %s29, 0
    %p318 = por %p316, %p317
    %s320 = sadd.s32 %s319, 1
    %p323 = scmp.eq.s32.totalorder %s23, 3
    %p324 = scmp.ne.s32.totalorder %s319, %s321
    %p325 = scmp.eq.s32.totalorder %s23, 0
    %p326 = por %p324, %p325
    %p327 = scmp.ne.s32.totalorder %s319, %s321
    %p328 = scmp.eq.s32.totalorder %s28, 3
    %p329 = por %p327, %p328
    %p330 = scmp.ne.s32.totalorder %s321, %s322
    %p331 = scmp.eq.s32.totalorder %s28, 0
    %p332 = por %p330, %p331
    %p333 = scmp.ne.s32.totalorder %s321, %s322
    %p334 = scmp.eq.s32.totalorder %s29, 3
    %p335 = por %p333, %p334
    %p337 = scmp.ne.s32.totalorder %s322, %s336
    %p338 = scmp.eq.s32.totalorder %s29, 0
    %p339 = por %p337, %p338
    %s340 = ssub.s32 %s23, %s30
    %p341 = scmp.eq.s32.totalorder %s340, 0
    %s343 = sadd.s32 %s342, 1
    %s344 = scalar_select %p341, %s342, %s343
    %p347 = pneg %p341
    %p348 = scmp.eq.s32.totalorder %s23, 3
    %p349 = por %p347, %p348
    %p350 = scmp.ne.s32.totalorder %s342, %s345
    %p351 = scmp.eq.s32.totalorder %s23, 0
    %p352 = por %p350, %p351
    %p353 = scmp.ne.s32.totalorder %s342, %s345
    %p354 = scmp.eq.s32.totalorder %s28, 3
    %p355 = por %p353, %p354
    %p356 = scmp.ne.s32.totalorder %s345, %s346
    %p357 = scmp.eq.s32.totalorder %s28, 0
    %p358 = por %p356, %p357
    %p359 = scmp.ne.s32.totalorder %s345, %s346
    %p360 = scmp.eq.s32.totalorder %s29, 3
    %p361 = por %p359, %p360
    %p363 = scmp.ne.s32.totalorder %s346, %s362
    %p364 = scmp.eq.s32.totalorder %s29, 0
    %p365 = por %p363, %p364
    %p366 = scmp.le.s32.totalorder 1, %s23
    %p367 = scmp.lt.s32.totalorder %s23, 5
    %p368 = pnand %p366, %p367
    %p369 = pneg %p368
    // Predicated region
    $region9: #{atomgc_forward.1} parent=5 // pred_check
      _
    $region10: #{atomgc_forward.1} parent=5 // pred_check_branch
      %371 = sbr.rel (%p368) target = $region12
    $region11: #{atomgc_forward.1} parent=5 // pred_region
      %s372 = ssub.s32 %s23, 1
      // Predicated region
      $region13: #{atomgc_forward.1} parent=11 // pred_check
        %p373 = pneg %p122
      $region14: #{atomgc_forward.1} parent=11 // pred_check_branch
        %375 = sbr.rel (%p373) target = $region16
      $region15: #{atomgc_forward.1} parent=11 // pred_region
        _
      $region16: #{atomgc_forward.1} parent=11 // pred_fallthru
        _
      // Predicated region
      $region17: #{atomgc_forward.1} parent=11 // pred_check
        %p376 = pneg %p143
      $region18: #{atomgc_forward.1} parent=11 // pred_check_branch
        %378 = sbr.rel (%p376) target = $region20
      $region19: #{atomgc_forward.1} parent=11 // pred_region
        _
      $region20: #{atomgc_forward.1} parent=11 // pred_fallthru
        _
      // Predicated region
      $region21: #{atomgc_forward.1} parent=11 // pred_check
        %p379 = pneg %p164
      $region22: #{atomgc_forward.1} parent=11 // pred_check_branch
        %381 = sbr.rel (%p379) target = $region24
      $region23: #{atomgc_forward.1} parent=11 // pred_region
        _
      $region24: #{atomgc_forward.1} parent=11 // pred_fallthru
        _
      // Predicated region
      $region25: #{atomgc_forward.1} parent=11 // pred_check
        %p382 = pneg %p185
      $region26: #{atomgc_forward.1} parent=11 // pred_check_branch
        %384 = sbr.rel (%p382) target = $region28
      $region27: #{atomgc_forward.1} parent=11 // pred_region
        _
      $region28: #{atomgc_forward.1} parent=11 // pred_fallthru
        _
      // Predicated region
      $region29: #{atomgc_forward.1} parent=11 // pred_check
        %p385 = pneg %p206
      $region30: #{atomgc_forward.1} parent=11 // pred_check_branch
        %387 = sbr.rel (%p385) target = $region32
      $region31: #{atomgc_forward.1} parent=11 // pred_region
        _
      $region32: #{atomgc_forward.1} parent=11 // pred_fallthru
        _
      // Predicated region
      $region33: #{atomgc_forward.1} parent=11 // pred_check
        %p388 = pneg %p227
      $region34: #{atomgc_forward.1} parent=11 // pred_check_branch
        %390 = sbr.rel (%p388) target = $region36
      $region35: #{atomgc_forward.1} parent=11 // pred_region
        _
      $region36: #{atomgc_forward.1} parent=11 // pred_fallthru
        _
      // Predicated region
      $region37: #{atomgc_forward.1} parent=11 // pred_check
        %p391 = pneg %p248
      $region38: #{atomgc_forward.1} parent=11 // pred_check_branch
        %393 = sbr.rel (%p391) target = $region40
      $region39: #{atomgc_forward.1} parent=11 // pred_region
        _
      $region40: #{atomgc_forward.1} parent=11 // pred_fallthru
        _
      // Predicated region
      $region41: #{atomgc_forward.1} parent=11 // pred_check
        %p394 = pneg %p269
      $region42: #{atomgc_forward.1} parent=11 // pred_check_branch
        %396 = sbr.rel (%p394) target = $region44
      $region43: #{atomgc_forward.1} parent=11 // pred_region
        _
      $region44: #{atomgc_forward.1} parent=11 // pred_fallthru
        _
      // Predicated region
      $region45: #{atomgc_forward.1} parent=11 // pred_check
        %p397 = pneg %p290
      $region46: #{atomgc_forward.1} parent=11 // pred_check_branch
        %399 = sbr.rel (%p397) target = $region48
      $region47: #{atomgc_forward.1} parent=11 // pred_region
        _
      $region48: #{atomgc_forward.1} parent=11 // pred_fallthru
        _
      // Predicated region
      $region49: #{atomgc_forward.1} parent=11 // pred_check
        %p400 = pneg %p311
      $region50: #{atomgc_forward.1} parent=11 // pred_check_branch
        %402 = sbr.rel (%p400) target = $region52
      $region51: #{atomgc_forward.1} parent=11 // pred_region
        _
      $region52: #{atomgc_forward.1} parent=11 // pred_fallthru
        _
    $region12: #{atomgc_forward.1} parent=5 // pred_fallthru
      _
    %p403 = scmp.lt.s32.totalorder %s23, 4
    // Predicated region
    $region53: #{atomgc_forward.1} parent=5 // pred_check
      %p404 = pneg %p403
    $region54: #{atomgc_forward.1} parent=5 // pred_check_branch
      %406 = sbr.rel (%p404) target = $region56
    $region55: #{atomgc_forward.1} parent=5 // pred_region
      // Predicated region
      $region57: #{atomgc_forward.1} parent=55 // pred_check
        %p407 = pneg %p43
      $region58: #{atomgc_forward.1} parent=55 // pred_check_branch
        %409 = sbr.rel (%p407) target = $region60
      $region59: #{atomgc_forward.1} parent=55 // pred_region
        %p410 = scmp.lt.s32.totalorder %s23, 3
        %s411 = scalar_select %p410, %s23, 3
        %s412 = scalar_lea.vmem %s0, %s411
      $region60: #{atomgc_forward.1} parent=55 // pred_fallthru
        _
      // Predicated region
      $region61: #{atomgc_forward.1} parent=55 // pred_check
        %p413 = pneg %p69
      $region62: #{atomgc_forward.1} parent=55 // pred_check_branch
        %415 = sbr.rel (%p413) target = $region64
      $region63: #{atomgc_forward.1} parent=55 // pred_region
        %p416 = scmp.lt.s32.totalorder %s23, 3
        %s417 = scalar_select %p416, %s23, 3
        %s418 = scalar_lea.vmem %s1, %s417
      $region64: #{atomgc_forward.1} parent=55 // pred_fallthru
        _
      // Predicated region
      $region65: #{atomgc_forward.1} parent=55 // pred_check
        %p419 = pneg %p95
      $region66: #{atomgc_forward.1} parent=55 // pred_check_branch
        %421 = sbr.rel (%p419) target = $region68
      $region67: #{atomgc_forward.1} parent=55 // pred_region
        %s422 = smul.u32 16, %s23
        %p423 = scmp.lt.s32.totalorder %s422, 63
        %s424 = scalar_select %p423, %s422, 63
        %s425 = smul.addr %s424, 4
        %s426 = scalar_lea.vmem %s2, %s425
        %s427 = smul.u32 16, %s23
      $region68: #{atomgc_forward.1} parent=55 // pred_fallthru
        _
    $region56: #{atomgc_forward.1} parent=5 // pred_fallthru
      _
    %p428 = scmp.le.s32.totalorder 1, %s23
    %p429 = scmp.lt.s32.totalorder %s23, 5
    %p430 = pnand %p428, %p429
    %p431 = pneg %p430
    // Predicated region
    $region69: #{atomgc_forward.1} parent=5 // pred_check
      _
    $region70: #{atomgc_forward.1} parent=5 // pred_check_branch
      %433 = sbr.rel (%p430) target = $region72
    $region71: #{atomgc_forward.1} parent=5 // pred_region
      %s434 = ssub.s32 %s23, 1
      %p435 = scmp.lt.s32.totalorder %s28, 3
      %s436 = scalar_select %p435, %s28, 3
      %s437 = scalar_lea.vmem %s0, %s436
      %p438 = pneg %p49
      %p439 = pneg %p46
      %p440 = scmp.lt.s32.totalorder %s28, 3
      %s441 = scalar_select %p440, %s28, 3
      %s442 = scalar_lea.vmem %s1, %s441
      %p443 = pneg %p75
      %p444 = pneg %p72
      %s445 = smul.u32 16, %s28
      %p446 = scmp.lt.s32.totalorder %s445, 63
      %s447 = scalar_select %p446, %s445, 63
      %s448 = smul.addr %s447, 4
      %s449 = scalar_lea.vmem %s2, %s448
      %p450 = pneg %p101
      %p451 = pneg %p98
      %p452 = pneg %p122
      %p453 = pneg %p119
      %p454 = pneg %p143
      %p455 = pneg %p140
      %p456 = pneg %p164
      %p457 = pneg %p161
      %p458 = pneg %p185
      %p459 = pneg %p182
      %p460 = pneg %p206
      %p461 = pneg %p203
      %p462 = pneg %p227
      %p463 = pneg %p224
      %p464 = pneg %p248
      %p465 = pneg %p245
      %p466 = pneg %p269
      %p467 = pneg %p266
      %p468 = pneg %p290
      %p469 = pneg %p287
      %p470 = pneg %p311
      %p471 = pneg %p308
      %p472 = pneg %p332
      %p473 = pneg %p329
      %p474 = pneg %p358
      %p475 = pneg %p355
      %s476 = smul.u32 16, %s28
      %p477 = scmp.lt.s32.totalorder %s476, 63
      %s478 = scalar_select %p477, %s476, 63
      %s479 = smul.addr %s478, 8
      %s480 = scalar_lea.vmem %s14, %s479
      %p481 = scmp.lt.s32.totalorder %s28, 3
      %s482 = scalar_select %p481, %s28, 3
      %s483 = scalar_lea.vmem %s0, %s482
      %p484 = scmp.lt.s32.totalorder %s28, 3
      %s485 = scalar_select %p484, %s28, 3
      %s486 = scalar_lea.vmem %s1, %s485
      %s487 = smul.u32 16, %s28
      %p488 = scmp.lt.s32.totalorder %s487, 63
      %s489 = scalar_select %p488, %s487, 63
      %s490 = smul.addr %s489, 4
      %s491 = scalar_lea.vmem %s2, %s490
      %s492 = smul.u32 16, %s28
      %s493 = smul.u32 16, %s28
      %p494 = scmp.lt.s32.totalorder %s493, 63
      %s495 = scalar_select %p494, %s493, 63
      %s496 = smul.addr %s495, 8
      %s497 = scalar_lea.vmem %s14, %s496
      %s498 = smul.u32 16, %s28
      %p500 = scmp.eq.s32.totalorder %s28, 0
      // Predicated region
      $region73: #{atomgc_forward.1} parent=71 // pred_check
        %p501 = pneg %p500
      $region74: #{atomgc_forward.1} parent=71 // pred_check_branch
        %503 = sbr.rel (%p501) target = $region76
      $region75: #{atomgc_forward.1} parent=71 // pred_region
        %504 = vst [vmem:[#allocation2] sm:$0xff] 0.0
        %505 = vst [vmem:[#allocation2 + $0x8] sm:$0xff] 0.0
        %506 = vst [vmem:[#allocation2 + $0x10] sm:$0xff] 0.0
        %507 = vst [vmem:[#allocation2 + $0x18] sm:$0xff] 0.0
        %508 = vst [vmem:[#allocation2 + $0x20] sm:$0xff] 0.0
        %509 = vst [vmem:[#allocation2 + $0x28] sm:$0xff] 0.0
        %510 = vst [vmem:[#allocation2 + $0x30] sm:$0xff] 0.0
        %511 = vst [vmem:[#allocation2 + $0x38] sm:$0xff] 0.0
      $region76: #{atomgc_forward.1} parent=71 // pred_fallthru
        _
      %v512 = vld [vmem:[%s3] sm:$0xf]
      %v513 = vld [vmem:[%s3 + $0x4] sm:$0xf]
      %v514 = vld [vmem:[%s3 + $0x8] sm:$0xf]
      %v515 = vld [vmem:[%s3 + $0xc] sm:$0xf]
      %v516 = vld [vmem:[%s3 + $0x10] sm:$0xf]
      %v517 = vld [vmem:[%s3 + $0x14] sm:$0xf]
      %v518 = vld [vmem:[%s3 + $0x18] sm:$0xf]
      %v519 = vld [vmem:[%s3 + $0x1c] sm:$0xf]
      %v520 = vld [vmem:[%s491] sm:$0xf]
      %v521 = vld [vmem:[%s491 + $0x4] sm:$0xf]
      %v522 = vld [vmem:[%s491 + $0x8] sm:$0xf]
      %v523 = vld [vmem:[%s491 + $0xc] sm:$0xf]
      %v524 = vld [vmem:[%s491 + $0x10] sm:$0xf]
      %v525 = vld [vmem:[%s491 + $0x14] sm:$0xf]
      %v526 = vld [vmem:[%s491 + $0x18] sm:$0xf]
      %v527 = vld [vmem:[%s491 + $0x1c] sm:$0xf]
      %v528 = vld [vmem:[%s491 + $0x20] sm:$0xf]
      %v529 = vld [vmem:[%s491 + $0x24] sm:$0xf]
      %v530 = vld [vmem:[%s491 + $0x28] sm:$0xf]
      %v531 = vld [vmem:[%s491 + $0x2c] sm:$0xf]
      %v532 = vld [vmem:[%s491 + $0x30] sm:$0xf]
      %v533 = vld [vmem:[%s491 + $0x34] sm:$0xf]
      %v534 = vld [vmem:[%s491 + $0x38] sm:$0xf]
      %v535 = vld [vmem:[%s491 + $0x3c] sm:$0xf]
      %v536 = vlaneseq
      %v537 = vshrl.u32 %v536, 7
      %v538 = vadd.s32 %v537, 8
      %v539 = vadd.s32 %v537, 16
      %v540 = vadd.s32 %v537, 24
      %v541 = vadd.s32 %v537, 32
      %v542 = vadd.s32 %v537, 40
      %v543 = vadd.s32 %v537, 48
      %v544 = vadd.s32 %v537, 56
      %v545 = vld [vmem:[%s483] sm:$0x1]
      %v546 = vperm.slane %v545, 0
      %vm547 = vcmp.eq.s32.totalorder %v537, %v546
      %vm548 = vcmp.eq.s32.totalorder %v538, %v546
      %vm549 = vcmp.eq.s32.totalorder %v539, %v546
      %vm550 = vcmp.eq.s32.totalorder %v540, %v546
      %vm551 = vcmp.eq.s32.totalorder %v541, %v546
      %vm552 = vcmp.eq.s32.totalorder %v542, %v546
      %vm553 = vcmp.eq.s32.totalorder %v543, %v546
      %vm554 = vcmp.eq.s32.totalorder %v544, %v546
      %v555 = vsel %vm547, 1, 0
      %v556 = vsel %vm548, 1, 0
      %v557 = vsel %vm549, 1, 0
      %v558 = vsel %vm550, 1, 0
      %v559 = vsel %vm551, 1, 0
      %v560 = vsel %vm552, 1, 0
      %v561 = vsel %vm553, 1, 0
      %v562 = vsel %vm554, 1, 0
      %v563 = vcvt.s32.f32 %v555
      %v564 = vcvt.s32.f32 %v556
      %v565 = vcvt.s32.f32 %v557
      %v566 = vcvt.s32.f32 %v558
      %v567 = vcvt.s32.f32 %v559
      %v568 = vcvt.s32.f32 %v560
      %v569 = vcvt.s32.f32 %v561
      %v570 = vcvt.s32.f32 %v562
      %v571 = vpack.c.bf16 %v564, %v563
      %v572 = vpack.c.bf16 %v566, %v565
      %v573 = vpack.c.bf16 %v568, %v567
      %v574 = vpack.c.bf16 %v570, %v569
      %v575 = vld [vmem:[%s486] sm:$0x1]
      %v576 = vperm.slane %v575, 0
      %vm577 = vcmp.eq.s32.totalorder %v537, %v576
      %vm578 = vcmp.eq.s32.totalorder %v538, %v576
      %vm579 = vcmp.eq.s32.totalorder %v539, %v576
      %vm580 = vcmp.eq.s32.totalorder %v540, %v576
      %vm581 = vcmp.eq.s32.totalorder %v541, %v576
      %vm582 = vcmp.eq.s32.totalorder %v542, %v576
      %vm583 = vcmp.eq.s32.totalorder %v543, %v576
      %vm584 = vcmp.eq.s32.totalorder %v544, %v576
      %v585 = vsel %vm577, 1, 0
      %v586 = vsel %vm578, 1, 0
      %v587 = vsel %vm579, 1, 0
      %v588 = vsel %vm580, 1, 0
      %v589 = vsel %vm581, 1, 0
      %v590 = vsel %vm582, 1, 0
      %v591 = vsel %vm583, 1, 0
      %v592 = vsel %vm584, 1, 0
      %v593 = vcvt.s32.f32 %v585
      %v594 = vcvt.s32.f32 %v586
      %v595 = vcvt.s32.f32 %v587
      %v596 = vcvt.s32.f32 %v588
      %v597 = vcvt.s32.f32 %v589
      %v598 = vcvt.s32.f32 %v590
      %v599 = vcvt.s32.f32 %v591
      %v600 = vcvt.s32.f32 %v592
      %v601 = vpack.c.bf16 %v594, %v593
      %v602 = vpack.c.bf16 %v596, %v595
      %v603 = vpack.c.bf16 %v598, %v597
      %v604 = vpack.c.bf16 %v600, %v599
      %605 = vxpose.xlu0.c.b16.start [1/8] %v571, 128
      %606 = vxpose.xlu0.c.b16.cont [2/8] %v572, 128
      %607 = vxpose.xlu0.c.b16.cont [3/8] %v573, 128
      %608 = vxpose.xlu0.c.b16.cont [4/8] %v574, 128
      %609 = vxpose.xlu0.c.b16.cont [5/8] 0, 128
      %610 = vxpose.xlu0.c.b16.cont [6/8] 0, 128
      %611 = vxpose.xlu0.c.b16.cont [7/8] 0, 128
      %612 = vxpose.xlu0.c.b16.end [8/8] 0, 128
      %v613 = vpop.trf.xlu0
      %v614 = vpop.trf.xlu0
      %v615 = vpop.trf.xlu0
      %v616 = vpop.trf.xlu0
      %v617 = vpop.trf.xlu0
      %v618 = vpop.trf.xlu0
      %v619 = vpop.trf.xlu0
      %v620 = vpop.trf.xlu0
      %v629 = vunpack.c.l.b16 %v512
      %v630 = vunpack.c.l.b16 %v513
      %v631 = vunpack.c.l.b16 %v514
      %v632 = vunpack.c.l.b16 %v515
      %v633 = vunpack.c.l.b16 %v516
      %v634 = vunpack.c.l.b16 %v517
      %v635 = vunpack.c.l.b16 %v518
      %v636 = vunpack.c.l.b16 %v519
      %v637 = vpack.c.b16 %v630, %v629
      %v638 = vpack.c.b16 %v632, %v631
      %v639 = vpack.c.b16 %v634, %v633
      %v640 = vpack.c.b16 %v636, %v635
      %vm645 = vcmask 523264
      %v647 = vsel %vm645, %v613, 0
      %v650 = vsel %vm645, %v614, 0
      %v653 = vsel %vm645, %v615, 0
      %v656 = vsel %vm645, %v616, 0
      %v659 = vsel %vm645, %v617, 0
      %v662 = vsel %vm645, %v618, 0
      %v665 = vsel %vm645, %v619, 0
      %v668 = vsel %vm645, %v620, 0
      %670 = vmatpush.bf16.msra.mxu0 0
      %671 = vmatpush.bf16.msra.mxu0 0
      %672 = vmatpush.bf16.msra.mxu0 0
      %673 = vmatpush.bf16.msra.mxu0 0
      %674 = vmatpush.bf16.msra.mxu0 %v640
      %675 = vmatpush.bf16.msra.mxu0 %v639
      %676 = vmatpush.bf16.msra.mxu0 %v638
      %677 = vmatpush.bf16.msra.mxu0 %v637
      %678 = vmatmul.bf16.gmra.mxu0 %v647
      %v679 = vpop.f32.mrf.mxu0
      %v680 = vadd.f32 0.0, %v679
      %v681 = vpop.f32.mrf.mxu0
      %v682 = vadd.f32 0.0, %v681
      %683 = vmatmul.bf16.gmra.mxu0 %v650
      %v684 = vpop.f32.mrf.mxu0
      %v685 = vadd.f32 0.0, %v684
      %v686 = vpop.f32.mrf.mxu0
      %v687 = vadd.f32 0.0, %v686
      %688 = vmatmul.bf16.gmra.mxu0 %v653
      %v689 = vpop.f32.mrf.mxu0
      %v690 = vadd.f32 0.0, %v689
      %v691 = vpop.f32.mrf.mxu0
      %v692 = vadd.f32 0.0, %v691
      %693 = vmatmul.bf16.gmra.mxu0 %v656
      %v694 = vpop.f32.mrf.mxu0
      %v695 = vadd.f32 0.0, %v694
      %v696 = vpop.f32.mrf.mxu0
      %v697 = vadd.f32 0.0, %v696
      %698 = vmatmul.bf16.gmra.mxu0 %v659
      %v699 = vpop.f32.mrf.mxu0
      %v700 = vadd.f32 0.0, %v699
      %v701 = vpop.f32.mrf.mxu0
      %v702 = vadd.f32 0.0, %v701
      %703 = vmatmul.bf16.gmra.mxu0 %v662
      %v704 = vpop.f32.mrf.mxu0
      %v705 = vadd.f32 0.0, %v704
      %v706 = vpop.f32.mrf.mxu0
      %v707 = vadd.f32 0.0, %v706
      %708 = vmatmul.bf16.gmra.mxu0 %v665
      %v709 = vpop.f32.mrf.mxu0
      %v710 = vadd.f32 0.0, %v709
      %v711 = vpop.f32.mrf.mxu0
      %v712 = vadd.f32 0.0, %v711
      %713 = vmatmul.bf16.gmra.mxu0 %v668
      %v714 = vpop.f32.mrf.mxu0
      %v715 = vadd.f32 0.0, %v714
      %v716 = vpop.f32.mrf.mxu0
      %v717 = vadd.f32 0.0, %v716
      %718 = vdwg.mxu0
      %719 = vxpose.xlu0.c.b16.start [1/8] %v601, 128
      %720 = vxpose.xlu0.c.b16.cont [2/8] %v602, 128
      %721 = vxpose.xlu0.c.b16.cont [3/8] %v603, 128
      %722 = vxpose.xlu0.c.b16.cont [4/8] %v604, 128
      %723 = vxpose.xlu0.c.b16.cont [5/8] 0, 128
      %724 = vxpose.xlu0.c.b16.cont [6/8] 0, 128
      %725 = vxpose.xlu0.c.b16.cont [7/8] 0, 128
      %726 = vxpose.xlu0.c.b16.end [8/8] 0, 128
      %v727 = vpop.trf.xlu0
      %v728 = vpop.trf.xlu0
      %v729 = vpop.trf.xlu0
      %v730 = vpop.trf.xlu0
      %v731 = vpop.trf.xlu0
      %v732 = vpop.trf.xlu0
      %v733 = vpop.trf.xlu0
      %v734 = vpop.trf.xlu0
      %v736 = vsel %vm645, %v727, 0
      %v739 = vsel %vm645, %v728, 0
      %v742 = vsel %vm645, %v729, 0
      %v745 = vsel %vm645, %v730, 0
      %v748 = vsel %vm645, %v731, 0
      %v751 = vsel %vm645, %v732, 0
      %v754 = vsel %vm645, %v733, 0
      %v757 = vsel %vm645, %v734, 0
      %759 = vmatpush.bf16.msra.mxu0 0
      %760 = vmatpush.bf16.msra.mxu0 0
      %761 = vmatpush.bf16.msra.mxu0 0
      %762 = vmatpush.bf16.msra.mxu0 0
      %763 = vmatpush.bf16.msra.mxu0 %v640
      %764 = vmatpush.bf16.msra.mxu0 %v639
      %765 = vmatpush.bf16.msra.mxu0 %v638
      %766 = vmatpush.bf16.msra.mxu0 %v637
      %767 = vmatmul.bf16.gmra.mxu0 %v736
      %v768 = vpop.f32.mrf.mxu0
      %v769 = vadd.f32 0.0, %v768
      %v770 = vpop.f32.mrf.mxu0
      %v771 = vadd.f32 0.0, %v770
      %772 = vmatmul.bf16.gmra.mxu0 %v739
      %v773 = vpop.f32.mrf.mxu0
      %v774 = vadd.f32 0.0, %v773
      %v775 = vpop.f32.mrf.mxu0
      %v776 = vadd.f32 0.0, %v775
      %777 = vmatmul.bf16.gmra.mxu0 %v742
      %v778 = vpop.f32.mrf.mxu0
      %v779 = vadd.f32 0.0, %v778
      %v780 = vpop.f32.mrf.mxu0
      %v781 = vadd.f32 0.0, %v780
      %782 = vmatmul.bf16.gmra.mxu0 %v745
      %v783 = vpop.f32.mrf.mxu0
      %v784 = vadd.f32 0.0, %v783
      %v785 = vpop.f32.mrf.mxu0
      %v786 = vadd.f32 0.0, %v785
      %787 = vmatmul.bf16.gmra.mxu0 %v748
      %v788 = vpop.f32.mrf.mxu0
      %v789 = vadd.f32 0.0, %v788
      %v790 = vpop.f32.mrf.mxu0
      %v791 = vadd.f32 0.0, %v790
      %792 = vmatmul.bf16.gmra.mxu0 %v751
      %v793 = vpop.f32.mrf.mxu0
      %v794 = vadd.f32 0.0, %v793
      %v795 = vpop.f32.mrf.mxu0
      %v796 = vadd.f32 0.0, %v795
      %797 = vmatmul.bf16.gmra.mxu0 %v754
      %v798 = vpop.f32.mrf.mxu0
      %v799 = vadd.f32 0.0, %v798
      %v800 = vpop.f32.mrf.mxu0
      %v801 = vadd.f32 0.0, %v800
      %802 = vmatmul.bf16.gmra.mxu0 %v757
      %v803 = vpop.f32.mrf.mxu0
      %v804 = vadd.f32 0.0, %v803
      %v805 = vpop.f32.mrf.mxu0
      %v806 = vadd.f32 0.0, %v805
      %807 = vdwg.mxu0
      %v808 = vpack.c.bf16 %v682, %v680
      %v809 = vpack.c.bf16 %v687, %v685
      %v810 = vpack.c.bf16 %v692, %v690
      %v811 = vpack.c.bf16 %v697, %v695
      %v812 = vpack.c.bf16 %v702, %v700
      %v813 = vpack.c.bf16 %v707, %v705
      %v814 = vpack.c.bf16 %v712, %v710
      %v815 = vpack.c.bf16 %v717, %v715
      %v816 = vld [vmem:[%s4] sm:$0xf]
      %v817 = vld [vmem:[%s4 + $0x4] sm:$0xf]
      %v818 = vld [vmem:[%s4 + $0x8] sm:$0xf]
      %v819 = vld [vmem:[%s4 + $0xc] sm:$0xf]
      %v820 = vld [vmem:[%s4 + $0x10] sm:$0xf]
      %v821 = vld [vmem:[%s4 + $0x14] sm:$0xf]
      %v822 = vld [vmem:[%s4 + $0x18] sm:$0xf]
      %v823 = vld [vmem:[%s4 + $0x1c] sm:$0xf]
      %v824 = vld [vmem:[%s4 + $0x20] sm:$0xf]
      %v825 = vld [vmem:[%s4 + $0x24] sm:$0xf]
      %v826 = vld [vmem:[%s4 + $0x28] sm:$0xf]
      %v827 = vld [vmem:[%s4 + $0x2c] sm:$0xf]
      %v828 = vld [vmem:[%s4 + $0x30] sm:$0xf]
      %v829 = vld [vmem:[%s4 + $0x34] sm:$0xf]
      %v830 = vld [vmem:[%s4 + $0x38] sm:$0xf]
      %v831 = vld [vmem:[%s4 + $0x3c] sm:$0xf]
      %v832 = vld [vmem:[%s5] sm:$0xf]
      %v833 = vld [vmem:[%s5 + $0x4] sm:$0xf]
      %v834 = vld [vmem:[%s5 + $0x8] sm:$0xf]
      %v835 = vld [vmem:[%s5 + $0xc] sm:$0xf]
      %v836 = vld [vmem:[%s5 + $0x10] sm:$0xf]
      %v837 = vld [vmem:[%s5 + $0x14] sm:$0xf]
      %v838 = vld [vmem:[%s5 + $0x18] sm:$0xf]
      %v839 = vld [vmem:[%s5 + $0x1c] sm:$0xf]
      %v840 = vld [vmem:[%s5 + $0x20] sm:$0xf]
      %v841 = vld [vmem:[%s5 + $0x24] sm:$0xf]
      %v842 = vld [vmem:[%s5 + $0x28] sm:$0xf]
      %v843 = vld [vmem:[%s5 + $0x2c] sm:$0xf]
      %v844 = vld [vmem:[%s5 + $0x30] sm:$0xf]
      %v845 = vld [vmem:[%s5 + $0x34] sm:$0xf]
      %v846 = vld [vmem:[%s5 + $0x38] sm:$0xf]
      %v847 = vld [vmem:[%s5 + $0x3c] sm:$0xf]
      %v864 = vunpack.c.l.b16 %v520
      %v865 = vunpack.c.l.b16 %v521
      %v866 = vunpack.c.l.b16 %v522
      %v867 = vunpack.c.l.b16 %v523
      %v868 = vunpack.c.l.b16 %v524
      %v869 = vunpack.c.l.b16 %v525
      %v870 = vunpack.c.l.b16 %v526
      %v871 = vunpack.c.l.b16 %v527
      %v872 = vunpack.c.l.b16 %v528
      %v873 = vunpack.c.l.b16 %v529
      %v874 = vunpack.c.l.b16 %v530
      %v875 = vunpack.c.l.b16 %v531
      %v876 = vunpack.c.l.b16 %v532
      %v877 = vunpack.c.l.b16 %v533
      %v878 = vunpack.c.l.b16 %v534
      %v879 = vunpack.c.l.b16 %v535
      %v880 = vpack.c.b16 %v865, %v864
      %v881 = vpack.c.b16 %v867, %v866
      %v882 = vpack.c.b16 %v869, %v868
      %v883 = vpack.c.b16 %v871, %v870
      %v884 = vpack.c.b16 %v873, %v872
      %v885 = vpack.c.b16 %v875, %v874
      %v886 = vpack.c.b16 %v877, %v876
      %v887 = vpack.c.b16 %v879, %v878
      %v912 = vunpack.c.l.b16 %v832
      %v913 = vunpack.c.l.b16 %v833
      %v914 = vunpack.c.l.b16 %v834
      %v915 = vunpack.c.l.b16 %v835
      %v916 = vunpack.c.l.b16 %v836
      %v917 = vunpack.c.l.b16 %v837
      %v918 = vunpack.c.l.b16 %v838
      %v919 = vunpack.c.l.b16 %v839
      %v920 = vunpack.c.l.b16 %v840
      %v921 = vunpack.c.l.b16 %v841
      %v922 = vunpack.c.l.b16 %v842
      %v923 = vunpack.c.l.b16 %v843
      %v924 = vunpack.c.l.b16 %v844
      %v925 = vunpack.c.l.b16 %v845
      %v926 = vunpack.c.l.b16 %v846
      %v927 = vunpack.c.l.b16 %v847
      %v928 = vpack.c.b16 %v913, %v912
      %v929 = vpack.c.b16 %v915, %v914
      %v930 = vpack.c.b16 %v917, %v916
      %v931 = vpack.c.b16 %v919, %v918
      %v932 = vpack.c.b16 %v921, %v920
      %v933 = vpack.c.b16 %v923, %v922
      %v934 = vpack.c.b16 %v925, %v924
      %v935 = vpack.c.b16 %v927, %v926
      %944 = vmatpush.bf16.msra.mxu0 %v935
      %945 = vmatpush.bf16.msra.mxu0 %v934
      %946 = vmatpush.bf16.msra.mxu0 %v933
      %947 = vmatpush.bf16.msra.mxu0 %v932
      %948 = vmatpush.bf16.msra.mxu0 %v931
      %949 = vmatpush.bf16.msra.mxu0 %v930
      %950 = vmatpush.bf16.msra.mxu0 %v929
      %951 = vmatpush.bf16.msra.mxu0 %v928
      %952 = vmatmul.bf16.gmra.mxu0 %v880
      %v953 = vpop.f32.mrf.mxu0
      %v954 = vadd.f32 0.0, %v953
      %v955 = vpop.f32.mrf.mxu0
      %v956 = vadd.f32 0.0, %v955
      %957 = vmatmul.bf16.gmra.mxu0 %v881
      %v958 = vpop.f32.mrf.mxu0
      %v959 = vadd.f32 0.0, %v958
      %v960 = vpop.f32.mrf.mxu0
      %v961 = vadd.f32 0.0, %v960
      %962 = vmatmul.bf16.gmra.mxu0 %v882
      %v963 = vpop.f32.mrf.mxu0
      %v964 = vadd.f32 0.0, %v963
      %v965 = vpop.f32.mrf.mxu0
      %v966 = vadd.f32 0.0, %v965
      %967 = vmatmul.bf16.gmra.mxu0 %v883
      %v968 = vpop.f32.mrf.mxu0
      %v969 = vadd.f32 0.0, %v968
      %v970 = vpop.f32.mrf.mxu0
      %v971 = vadd.f32 0.0, %v970
      %972 = vmatmul.bf16.gmra.mxu0 %v884
      %v973 = vpop.f32.mrf.mxu0
      %v974 = vadd.f32 0.0, %v973
      %v975 = vpop.f32.mrf.mxu0
      %v976 = vadd.f32 0.0, %v975
      %977 = vmatmul.bf16.gmra.mxu0 %v885
      %v978 = vpop.f32.mrf.mxu0
      %v979 = vadd.f32 0.0, %v978
      %v980 = vpop.f32.mrf.mxu0
      %v981 = vadd.f32 0.0, %v980
      %982 = vmatmul.bf16.gmra.mxu0 %v886
      %v983 = vpop.f32.mrf.mxu0
      %v984 = vadd.f32 0.0, %v983
      %v985 = vpop.f32.mrf.mxu0
      %v986 = vadd.f32 0.0, %v985
      %987 = vmatmul.bf16.gmra.mxu0 %v887
      %v988 = vpop.f32.mrf.mxu0
      %v989 = vadd.f32 0.0, %v988
      %v990 = vpop.f32.mrf.mxu0
      %v991 = vadd.f32 0.0, %v990
      %992 = vdwg.mxu0
      %v1009 = vunpack.c.l.b16 %v816
      %v1010 = vunpack.c.l.b16 %v817
      %v1011 = vunpack.c.l.b16 %v818
      %v1012 = vunpack.c.l.b16 %v819
      %v1013 = vunpack.c.l.b16 %v820
      %v1014 = vunpack.c.l.b16 %v821
      %v1015 = vunpack.c.l.b16 %v822
      %v1016 = vunpack.c.l.b16 %v823
      %v1017 = vunpack.c.l.b16 %v824
      %v1018 = vunpack.c.l.b16 %v825
      %v1019 = vunpack.c.l.b16 %v826
      %v1020 = vunpack.c.l.b16 %v827
      %v1021 = vunpack.c.l.b16 %v828
      %v1022 = vunpack.c.l.b16 %v829
      %v1023 = vunpack.c.l.b16 %v830
      %v1024 = vunpack.c.l.b16 %v831
      %v1025 = vpack.c.b16 %v1010, %v1009
      %v1026 = vpack.c.b16 %v1012, %v1011
      %v1027 = vpack.c.b16 %v1014, %v1013
      %v1028 = vpack.c.b16 %v1016, %v1015
      %v1029 = vpack.c.b16 %v1018, %v1017
      %v1030 = vpack.c.b16 %v1020, %v1019
      %v1031 = vpack.c.b16 %v1022, %v1021
      %v1032 = vpack.c.b16 %v1024, %v1023
      %1041 = vmatpush.bf16.msra.mxu0 %v1032
      %1042 = vmatpush.bf16.msra.mxu0 %v1031
      %1043 = vmatpush.bf16.msra.mxu0 %v1030
      %1044 = vmatpush.bf16.msra.mxu0 %v1029
      %1045 = vmatpush.bf16.msra.mxu0 %v1028
      %1046 = vmatpush.bf16.msra.mxu0 %v1027
      %1047 = vmatpush.bf16.msra.mxu0 %v1026
      %1048 = vmatpush.bf16.msra.mxu0 %v1025
      %1049 = vmatmul.bf16.gmra.mxu0 %v808
      %v1050 = vpop.f32.mrf.mxu0
      %v1051 = vadd.f32 %v954, %v1050
      %v1052 = vpop.f32.mrf.mxu0
      %v1053 = vadd.f32 %v956, %v1052
      %1054 = vmatmul.bf16.gmra.mxu0 %v809
      %v1055 = vpop.f32.mrf.mxu0
      %v1056 = vadd.f32 %v959, %v1055
      %v1057 = vpop.f32.mrf.mxu0
      %v1058 = vadd.f32 %v961, %v1057
      %1059 = vmatmul.bf16.gmra.mxu0 %v810
      %v1060 = vpop.f32.mrf.mxu0
      %v1061 = vadd.f32 %v964, %v1060
      %v1062 = vpop.f32.mrf.mxu0
      %v1063 = vadd.f32 %v966, %v1062
      %1064 = vmatmul.bf16.gmra.mxu0 %v811
      %v1065 = vpop.f32.mrf.mxu0
      %v1066 = vadd.f32 %v969, %v1065
      %v1067 = vpop.f32.mrf.mxu0
      %v1068 = vadd.f32 %v971, %v1067
      %1069 = vmatmul.bf16.gmra.mxu0 %v812
      %v1070 = vpop.f32.mrf.mxu0
      %v1071 = vadd.f32 %v974, %v1070
      %v1072 = vpop.f32.mrf.mxu0
      %v1073 = vadd.f32 %v976, %v1072
      %1074 = vmatmul.bf16.gmra.mxu0 %v813
      %v1075 = vpop.f32.mrf.mxu0
      %v1076 = vadd.f32 %v979, %v1075
      %v1077 = vpop.f32.mrf.mxu0
      %v1078 = vadd.f32 %v981, %v1077
      %1079 = vmatmul.bf16.gmra.mxu0 %v814
      %v1080 = vpop.f32.mrf.mxu0
      %v1081 = vadd.f32 %v984, %v1080
      %v1082 = vpop.f32.mrf.mxu0
      %v1083 = vadd.f32 %v986, %v1082
      %1084 = vmatmul.bf16.gmra.mxu0 %v815
      %v1085 = vpop.f32.mrf.mxu0
      %v1086 = vadd.f32 %v989, %v1085
      %v1087 = vpop.f32.mrf.mxu0
      %v1088 = vadd.f32 %v991, %v1087
      %1089 = vdwg.mxu0
      %v1090 = vpack.c.bf16 %v771, %v769
      %v1091 = vpack.c.bf16 %v776, %v774
      %v1092 = vpack.c.bf16 %v781, %v779
      %v1093 = vpack.c.bf16 %v786, %v784
      %v1094 = vpack.c.bf16 %v791, %v789
      %v1095 = vpack.c.bf16 %v796, %v794
      %v1096 = vpack.c.bf16 %v801, %v799
      %v1097 = vpack.c.bf16 %v806, %v804
      %v1098 = vld [vmem:[%s6] sm:$0xf]
      %v1099 = vld [vmem:[%s6 + $0x4] sm:$0xf]
      %v1100 = vld [vmem:[%s6 + $0x8] sm:$0xf]
      %v1101 = vld [vmem:[%s6 + $0xc] sm:$0xf]
      %v1102 = vld [vmem:[%s6 + $0x10] sm:$0xf]
      %v1103 = vld [vmem:[%s6 + $0x14] sm:$0xf]
      %v1104 = vld [vmem:[%s6 + $0x18] sm:$0xf]
      %v1105 = vld [vmem:[%s6 + $0x1c] sm:$0xf]
      %v1106 = vld [vmem:[%s6 + $0x20] sm:$0xf]
      %v1107 = vld [vmem:[%s6 + $0x24] sm:$0xf]
      %v1108 = vld [vmem:[%s6 + $0x28] sm:$0xf]
      %v1109 = vld [vmem:[%s6 + $0x2c] sm:$0xf]
      %v1110 = vld [vmem:[%s6 + $0x30] sm:$0xf]
      %v1111 = vld [vmem:[%s6 + $0x34] sm:$0xf]
      %v1112 = vld [vmem:[%s6 + $0x38] sm:$0xf]
      %v1113 = vld [vmem:[%s6 + $0x3c] sm:$0xf]
      %v1130 = vunpack.c.l.b16 %v1098
      %v1131 = vunpack.c.l.b16 %v1099
      %v1132 = vunpack.c.l.b16 %v1100
      %v1133 = vunpack.c.l.b16 %v1101
      %v1134 = vunpack.c.l.b16 %v1102
      %v1135 = vunpack.c.l.b16 %v1103
      %v1136 = vunpack.c.l.b16 %v1104
      %v1137 = vunpack.c.l.b16 %v1105
      %v1138 = vunpack.c.l.b16 %v1106
      %v1139 = vunpack.c.l.b16 %v1107
      %v1140 = vunpack.c.l.b16 %v1108
      %v1141 = vunpack.c.l.b16 %v1109
      %v1142 = vunpack.c.l.b16 %v1110
      %v1143 = vunpack.c.l.b16 %v1111
      %v1144 = vunpack.c.l.b16 %v1112
      %v1145 = vunpack.c.l.b16 %v1113
      %v1146 = vpack.c.b16 %v1131, %v1130
      %v1147 = vpack.c.b16 %v1133, %v1132
      %v1148 = vpack.c.b16 %v1135, %v1134
      %v1149 = vpack.c.b16 %v1137, %v1136
      %v1150 = vpack.c.b16 %v1139, %v1138
      %v1151 = vpack.c.b16 %v1141, %v1140
      %v1152 = vpack.c.b16 %v1143, %v1142
      %v1153 = vpack.c.b16 %v1145, %v1144
      %1162 = vmatpush.bf16.msra.mxu0 %v1153
      %1163 = vmatpush.bf16.msra.mxu0 %v1152
      %1164 = vmatpush.bf16.msra.mxu0 %v1151
      %1165 = vmatpush.bf16.msra.mxu0 %v1150
      %1166 = vmatpush.bf16.msra.mxu0 %v1149
      %1167 = vmatpush.bf16.msra.mxu0 %v1148
      %1168 = vmatpush.bf16.msra.mxu0 %v1147
      %1169 = vmatpush.bf16.msra.mxu0 %v1146
      %1170 = vmatmul.bf16.gmra.mxu0 %v1090
      %v1171 = vpop.f32.mrf.mxu0
      %v1172 = vadd.f32 0.0, %v1171
      %v1173 = vpop.f32.mrf.mxu0
      %v1174 = vadd.f32 0.0, %v1173
      %1175 = vmatmul.bf16.gmra.mxu0 %v1091
      %v1176 = vpop.f32.mrf.mxu0
      %v1177 = vadd.f32 0.0, %v1176
      %v1178 = vpop.f32.mrf.mxu0
      %v1179 = vadd.f32 0.0, %v1178
      %1180 = vmatmul.bf16.gmra.mxu0 %v1092
      %v1181 = vpop.f32.mrf.mxu0
      %v1182 = vadd.f32 0.0, %v1181
      %v1183 = vpop.f32.mrf.mxu0
      %v1184 = vadd.f32 0.0, %v1183
      %1185 = vmatmul.bf16.gmra.mxu0 %v1093
      %v1186 = vpop.f32.mrf.mxu0
      %v1187 = vadd.f32 0.0, %v1186
      %v1188 = vpop.f32.mrf.mxu0
      %v1189 = vadd.f32 0.0, %v1188
      %1190 = vmatmul.bf16.gmra.mxu0 %v1094
      %v1191 = vpop.f32.mrf.mxu0
      %v1192 = vadd.f32 0.0, %v1191
      %v1193 = vpop.f32.mrf.mxu0
      %v1194 = vadd.f32 0.0, %v1193
      %1195 = vmatmul.bf16.gmra.mxu0 %v1095
      %v1196 = vpop.f32.mrf.mxu0
      %v1197 = vadd.f32 0.0, %v1196
      %v1198 = vpop.f32.mrf.mxu0
      %v1199 = vadd.f32 0.0, %v1198
      %1200 = vmatmul.bf16.gmra.mxu0 %v1096
      %v1201 = vpop.f32.mrf.mxu0
      %v1202 = vadd.f32 0.0, %v1201
      %v1203 = vpop.f32.mrf.mxu0
      %v1204 = vadd.f32 0.0, %v1203
      %1205 = vmatmul.bf16.gmra.mxu0 %v1097
      %v1206 = vpop.f32.mrf.mxu0
      %v1207 = vadd.f32 0.0, %v1206
      %v1208 = vpop.f32.mrf.mxu0
      %v1209 = vadd.f32 0.0, %v1208
      %1210 = vdwg.mxu0
      %v1211 = vadd.f32 %v1051, %v1172
      %v1212 = vadd.f32 %v1053, %v1174
      %v1213 = vadd.f32 %v1056, %v1177
      %v1214 = vadd.f32 %v1058, %v1179
      %v1215 = vadd.f32 %v1061, %v1182
      %v1216 = vadd.f32 %v1063, %v1184
      %v1217 = vadd.f32 %v1066, %v1187
      %v1218 = vadd.f32 %v1068, %v1189
      %v1219 = vadd.f32 %v1071, %v1192
      %v1220 = vadd.f32 %v1073, %v1194
      %v1221 = vadd.f32 %v1076, %v1197
      %v1222 = vadd.f32 %v1078, %v1199
      %v1223 = vadd.f32 %v1081, %v1202
      %v1224 = vadd.f32 %v1083, %v1204
      %v1225 = vadd.f32 %v1086, %v1207
      %v1226 = vadd.f32 %v1088, %v1209
      %v1227 = vld [vmem:[%s7] sm:$0x1]
      %v1229 = vperm.slane %v1227, 0
      %v1231 = vadd.f32 %v1211, %v1229
      %v1232 = vadd.f32 %v1212, %v1229
      %v1233 = vadd.f32 %v1213, %v1229
      %v1234 = vadd.f32 %v1214, %v1229
      %v1235 = vadd.f32 %v1215, %v1229
      %v1236 = vadd.f32 %v1216, %v1229
      %v1237 = vadd.f32 %v1217, %v1229
      %v1238 = vadd.f32 %v1218, %v1229
      %v1239 = vadd.f32 %v1219, %v1229
      %v1240 = vadd.f32 %v1220, %v1229
      %v1241 = vadd.f32 %v1221, %v1229
      %v1242 = vadd.f32 %v1222, %v1229
      %v1243 = vadd.f32 %v1223, %v1229
      %v1244 = vadd.f32 %v1224, %v1229
      %v1245 = vadd.f32 %v1225, %v1229
      %v1246 = vadd.f32 %v1226, %v1229
      %v1247 = vmax.f32 %v1231, 0.0
      %v1248 = vmax.f32 %v1232, 0.0
      %v1249 = vmax.f32 %v1233, 0.0
      %v1250 = vmax.f32 %v1234, 0.0
      %v1251 = vmax.f32 %v1235, 0.0
      %v1252 = vmax.f32 %v1236, 0.0
      %v1253 = vmax.f32 %v1237, 0.0
      %v1254 = vmax.f32 %v1238, 0.0
      %v1255 = vmax.f32 %v1239, 0.0
      %v1256 = vmax.f32 %v1240, 0.0
      %v1257 = vmax.f32 %v1241, 0.0
      %v1258 = vmax.f32 %v1242, 0.0
      %v1259 = vmax.f32 %v1243, 0.0
      %v1260 = vmax.f32 %v1244, 0.0
      %v1261 = vmax.f32 %v1245, 0.0
      %v1262 = vmax.f32 %v1246, 0.0
      %v1263 = vld [vmem:[%s8] sm:$0x1]
      %v1265 = vperm.slane %v1263, 0
      %v1267 = vmul.f32 %v1247, %v1265
      %v1268 = vmul.f32 %v1248, %v1265
      %v1269 = vmul.f32 %v1249, %v1265
      %v1270 = vmul.f32 %v1250, %v1265
      %v1271 = vmul.f32 %v1251, %v1265
      %v1272 = vmul.f32 %v1252, %v1265
      %v1273 = vmul.f32 %v1253, %v1265
      %v1274 = vmul.f32 %v1254, %v1265
      %v1275 = vmul.f32 %v1255, %v1265
      %v1276 = vmul.f32 %v1256, %v1265
      %v1277 = vmul.f32 %v1257, %v1265
      %v1278 = vmul.f32 %v1258, %v1265
      %v1279 = vmul.f32 %v1259, %v1265
      %v1280 = vmul.f32 %v1260, %v1265
      %v1281 = vmul.f32 %v1261, %v1265
      %v1282 = vmul.f32 %v1262, %v1265
      %1283 = vadd.xlane.f32.xlu0 %v1267
      %v1284 = vpop.xlane.xlu0 %1283
      %1285 = vadd.xlane.f32.xlu0 %v1268
      %v1286 = vpop.xlane.xlu0 %1285
      %1287 = vadd.xlane.f32.xlu0 %v1269
      %v1288 = vpop.xlane.xlu0 %1287
      %1289 = vadd.xlane.f32.xlu0 %v1270
      %v1290 = vpop.xlane.xlu0 %1289
      %1291 = vadd.xlane.f32.xlu0 %v1271
      %v1292 = vpop.xlane.xlu0 %1291
      %1293 = vadd.xlane.f32.xlu0 %v1272
      %v1294 = vpop.xlane.xlu0 %1293
      %1295 = vadd.xlane.f32.xlu0 %v1273
      %v1296 = vpop.xlane.xlu0 %1295
      %1297 = vadd.xlane.f32.xlu0 %v1274
      %v1298 = vpop.xlane.xlu0 %1297
      %1299 = vadd.xlane.f32.xlu0 %v1275
      %v1300 = vpop.xlane.xlu0 %1299
      %1301 = vadd.xlane.f32.xlu0 %v1276
      %v1302 = vpop.xlane.xlu0 %1301
      %1303 = vadd.xlane.f32.xlu0 %v1277
      %v1304 = vpop.xlane.xlu0 %1303
      %1305 = vadd.xlane.f32.xlu0 %v1278
      %v1306 = vpop.xlane.xlu0 %1305
      %1307 = vadd.xlane.f32.xlu0 %v1279
      %v1308 = vpop.xlane.xlu0 %1307
      %1309 = vadd.xlane.f32.xlu0 %v1280
      %v1310 = vpop.xlane.xlu0 %1309
      %1311 = vadd.xlane.f32.xlu0 %v1281
      %v1312 = vpop.xlane.xlu0 %1311
      %1313 = vadd.xlane.f32.xlu0 %v1282
      %v1314 = vpop.xlane.xlu0 %1313
      %v1315 = vld [vmem:[#allocation3] sm:$0x1]
      %v1317 = vperm.slane %v1315, 0
      %v1319 = vadd.f32 %v1284, %v1317
      %v1320 = vadd.f32 %v1286, %v1317
      %v1321 = vadd.f32 %v1288, %v1317
      %v1322 = vadd.f32 %v1290, %v1317
      %v1323 = vadd.f32 %v1292, %v1317
      %v1324 = vadd.f32 %v1294, %v1317
      %v1325 = vadd.f32 %v1296, %v1317
      %v1326 = vadd.f32 %v1298, %v1317
      %v1327 = vadd.f32 %v1300, %v1317
      %v1328 = vadd.f32 %v1302, %v1317
      %v1329 = vadd.f32 %v1304, %v1317
      %v1330 = vadd.f32 %v1306, %v1317
      %v1331 = vadd.f32 %v1308, %v1317
      %v1332 = vadd.f32 %v1310, %v1317
      %v1333 = vadd.f32 %v1312, %v1317
      %v1334 = vadd.f32 %v1314, %v1317
      %v1335 = vxor.u32 %v1319, 2147483648
      %v1336 = vxor.u32 %v1320, 2147483648
      %v1337 = vxor.u32 %v1321, 2147483648
      %v1338 = vxor.u32 %v1322, 2147483648
      %v1339 = vxor.u32 %v1323, 2147483648
      %v1340 = vxor.u32 %v1324, 2147483648
      %v1341 = vxor.u32 %v1325, 2147483648
      %v1342 = vxor.u32 %v1326, 2147483648
      %v1343 = vxor.u32 %v1327, 2147483648
      %v1344 = vxor.u32 %v1328, 2147483648
      %v1345 = vxor.u32 %v1329, 2147483648
      %v1346 = vxor.u32 %v1330, 2147483648
      %v1347 = vxor.u32 %v1331, 2147483648
      %v1348 = vxor.u32 %v1332, 2147483648
      %v1349 = vxor.u32 %v1333, 2147483648
      %v1350 = vxor.u32 %v1334, 2147483648
      %v1351 = vmul.f32 %v1335, 1.442695
      %v1352 = vpow.pop %v1351
      %v1353 = vmul.f32 %v1336, 1.442695
      %v1354 = vpow.pop %v1353
      %v1355 = vmul.f32 %v1337, 1.442695
      %v1356 = vpow.pop %v1355
      %v1357 = vmul.f32 %v1338, 1.442695
      %v1358 = vpow.pop %v1357
      %v1359 = vmul.f32 %v1339, 1.442695
      %v1360 = vpow.pop %v1359
      %v1361 = vmul.f32 %v1340, 1.442695
      %v1362 = vpow.pop %v1361
      %v1363 = vmul.f32 %v1341, 1.442695
      %v1364 = vpow.pop %v1363
      %v1365 = vmul.f32 %v1342, 1.442695
      %v1366 = vpow.pop %v1365
      %v1367 = vmul.f32 %v1343, 1.442695
      %v1368 = vpow.pop %v1367
      %v1369 = vmul.f32 %v1344, 1.442695
      %v1370 = vpow.pop %v1369
      %v1371 = vmul.f32 %v1345, 1.442695
      %v1372 = vpow.pop %v1371
      %v1373 = vmul.f32 %v1346, 1.442695
      %v1374 = vpow.pop %v1373
      %v1375 = vmul.f32 %v1347, 1.442695
      %v1376 = vpow.pop %v1375
      %v1377 = vmul.f32 %v1348, 1.442695
      %v1378 = vpow.pop %v1377
      %v1379 = vmul.f32 %v1349, 1.442695
      %v1380 = vpow.pop %v1379
      %v1381 = vmul.f32 %v1350, 1.442695
      %v1382 = vpow.pop %v1381
      %v1383 = vadd.f32 %v1352, 1.0
      %v1384 = vadd.f32 %v1354, 1.0
      %v1385 = vadd.f32 %v1356, 1.0
      %v1386 = vadd.f32 %v1358, 1.0
      %v1387 = vadd.f32 %v1360, 1.0
      %v1388 = vadd.f32 %v1362, 1.0
      %v1389 = vadd.f32 %v1364, 1.0
      %v1390 = vadd.f32 %v1366, 1.0
      %v1391 = vadd.f32 %v1368, 1.0
      %v1392 = vadd.f32 %v1370, 1.0
      %v1393 = vadd.f32 %v1372, 1.0
      %v1394 = vadd.f32 %v1374, 1.0
      %v1395 = vadd.f32 %v1376, 1.0
      %v1396 = vadd.f32 %v1378, 1.0
      %v1397 = vadd.f32 %v1380, 1.0
      %v1398 = vadd.f32 %v1382, 1.0
      %v1399 = vrcp.pop %v1383
      %v1400 = vmul.f32 %v1383, %v1399
      %v1401 = vsub.f32 1.0, %v1400
      %v1402 = vmul.f32 %v1399, %v1401
      %v1403 = vadd.f32 %v1399, %v1402
      %vm1404 = vweird.f32 %v1383
      %vm1405 = vweird.f32 %v1399
      %vm1406 = vmor %vm1404, %vm1405
      %v1407 = vsel %vm1406, %v1399, %v1403
      %v1408 = vand.u32 2147483647, %v1383
      %vm1409 = vcmp.eq.f32.partialorder %v1408, 8.507059e+37
      %v1410 = vand.u32 %v1383, 2147483648
      %v1411 = vor.u32 1.1754944e-38, %v1410
      %v1412 = vsel %vm1409, %v1411, %v1407
      %v1413 = vmul.f32 1.0, %v1412
      %v1414 = vrcp.pop %v1384
      %v1415 = vmul.f32 %v1384, %v1414
      %v1416 = vsub.f32 1.0, %v1415
      %v1417 = vmul.f32 %v1414, %v1416
      %v1418 = vadd.f32 %v1414, %v1417
      %vm1419 = vweird.f32 %v1384
      %vm1420 = vweird.f32 %v1414
      %vm1421 = vmor %vm1419, %vm1420
      %v1422 = vsel %vm1421, %v1414, %v1418
      %v1423 = vand.u32 2147483647, %v1384
      %vm1424 = vcmp.eq.f32.partialorder %v1423, 8.507059e+37
      %v1425 = vand.u32 %v1384, 2147483648
      %v1426 = vor.u32 1.1754944e-38, %v1425
      %v1427 = vsel %vm1424, %v1426, %v1422
      %v1428 = vmul.f32 1.0, %v1427
      %v1429 = vrcp.pop %v1385
      %v1430 = vmul.f32 %v1385, %v1429
      %v1431 = vsub.f32 1.0, %v1430
      %v1432 = vmul.f32 %v1429, %v1431
      %v1433 = vadd.f32 %v1429, %v1432
      %vm1434 = vweird.f32 %v1385
      %vm1435 = vweird.f32 %v1429
      %vm1436 = vmor %vm1434, %vm1435
      %v1437 = vsel %vm1436, %v1429, %v1433
      %v1438 = vand.u32 2147483647, %v1385
      %vm1439 = vcmp.eq.f32.partialorder %v1438, 8.507059e+37
      %v1440 = vand.u32 %v1385, 2147483648
      %v1441 = vor.u32 1.1754944e-38, %v1440
      %v1442 = vsel %vm1439, %v1441, %v1437
      %v1443 = vmul.f32 1.0, %v1442
      %v1444 = vrcp.pop %v1386
      %v1445 = vmul.f32 %v1386, %v1444
      %v1446 = vsub.f32 1.0, %v1445
      %v1447 = vmul.f32 %v1444, %v1446
      %v1448 = vadd.f32 %v1444, %v1447
      %vm1449 = vweird.f32 %v1386
      %vm1450 = vweird.f32 %v1444
      %vm1451 = vmor %vm1449, %vm1450
      %v1452 = vsel %vm1451, %v1444, %v1448
      %v1453 = vand.u32 2147483647, %v1386
      %vm1454 = vcmp.eq.f32.partialorder %v1453, 8.507059e+37
      %v1455 = vand.u32 %v1386, 2147483648
      %v1456 = vor.u32 1.1754944e-38, %v1455
      %v1457 = vsel %vm1454, %v1456, %v1452
      %v1458 = vmul.f32 1.0, %v1457
      %v1459 = vrcp.pop %v1387
      %v1460 = vmul.f32 %v1387, %v1459
      %v1461 = vsub.f32 1.0, %v1460
      %v1462 = vmul.f32 %v1459, %v1461
      %v1463 = vadd.f32 %v1459, %v1462
      %vm1464 = vweird.f32 %v1387
      %vm1465 = vweird.f32 %v1459
      %vm1466 = vmor %vm1464, %vm1465
      %v1467 = vsel %vm1466, %v1459, %v1463
      %v1468 = vand.u32 2147483647, %v1387
      %vm1469 = vcmp.eq.f32.partialorder %v1468, 8.507059e+37
      %v1470 = vand.u32 %v1387, 2147483648
      %v1471 = vor.u32 1.1754944e-38, %v1470
      %v1472 = vsel %vm1469, %v1471, %v1467
      %v1473 = vmul.f32 1.0, %v1472
      %v1474 = vrcp.pop %v1388
      %v1475 = vmul.f32 %v1388, %v1474
      %v1476 = vsub.f32 1.0, %v1475
      %v1477 = vmul.f32 %v1474, %v1476
      %v1478 = vadd.f32 %v1474, %v1477
      %vm1479 = vweird.f32 %v1388
      %vm1480 = vweird.f32 %v1474
      %vm1481 = vmor %vm1479, %vm1480
      %v1482 = vsel %vm1481, %v1474, %v1478
      %v1483 = vand.u32 2147483647, %v1388
      %vm1484 = vcmp.eq.f32.partialorder %v1483, 8.507059e+37
      %v1485 = vand.u32 %v1388, 2147483648
      %v1486 = vor.u32 1.1754944e-38, %v1485
      %v1487 = vsel %vm1484, %v1486, %v1482
      %v1488 = vmul.f32 1.0, %v1487
      %v1489 = vrcp.pop %v1389
      %v1490 = vmul.f32 %v1389, %v1489
      %v1491 = vsub.f32 1.0, %v1490
      %v1492 = vmul.f32 %v1489, %v1491
      %v1493 = vadd.f32 %v1489, %v1492
      %vm1494 = vweird.f32 %v1389
      %vm1495 = vweird.f32 %v1489
      %vm1496 = vmor %vm1494, %vm1495
      %v1497 = vsel %vm1496, %v1489, %v1493
      %v1498 = vand.u32 2147483647, %v1389
      %vm1499 = vcmp.eq.f32.partialorder %v1498, 8.507059e+37
      %v1500 = vand.u32 %v1389, 2147483648
      %v1501 = vor.u32 1.1754944e-38, %v1500
      %v1502 = vsel %vm1499, %v1501, %v1497
      %v1503 = vmul.f32 1.0, %v1502
      %v1504 = vrcp.pop %v1390
      %v1505 = vmul.f32 %v1390, %v1504
      %v1506 = vsub.f32 1.0, %v1505
      %v1507 = vmul.f32 %v1504, %v1506
      %v1508 = vadd.f32 %v1504, %v1507
      %vm1509 = vweird.f32 %v1390
      %vm1510 = vweird.f32 %v1504
      %vm1511 = vmor %vm1509, %vm1510
      %v1512 = vsel %vm1511, %v1504, %v1508
      %v1513 = vand.u32 2147483647, %v1390
      %vm1514 = vcmp.eq.f32.partialorder %v1513, 8.507059e+37
      %v1515 = vand.u32 %v1390, 2147483648
      %v1516 = vor.u32 1.1754944e-38, %v1515
      %v1517 = vsel %vm1514, %v1516, %v1512
      %v1518 = vmul.f32 1.0, %v1517
      %v1519 = vrcp.pop %v1391
      %v1520 = vmul.f32 %v1391, %v1519
      %v1521 = vsub.f32 1.0, %v1520
      %v1522 = vmul.f32 %v1519, %v1521
      %v1523 = vadd.f32 %v1519, %v1522
      %vm1524 = vweird.f32 %v1391
      %vm1525 = vweird.f32 %v1519
      %vm1526 = vmor %vm1524, %vm1525
      %v1527 = vsel %vm1526, %v1519, %v1523
      %v1528 = vand.u32 2147483647, %v1391
      %vm1529 = vcmp.eq.f32.partialorder %v1528, 8.507059e+37
      %v1530 = vand.u32 %v1391, 2147483648
      %v1531 = vor.u32 1.1754944e-38, %v1530
      %v1532 = vsel %vm1529, %v1531, %v1527
      %v1533 = vmul.f32 1.0, %v1532
      %v1534 = vrcp.pop %v1392
      %v1535 = vmul.f32 %v1392, %v1534
      %v1536 = vsub.f32 1.0, %v1535
      %v1537 = vmul.f32 %v1534, %v1536
      %v1538 = vadd.f32 %v1534, %v1537
      %vm1539 = vweird.f32 %v1392
      %vm1540 = vweird.f32 %v1534
      %vm1541 = vmor %vm1539, %vm1540
      %v1542 = vsel %vm1541, %v1534, %v1538
      %v1543 = vand.u32 2147483647, %v1392
      %vm1544 = vcmp.eq.f32.partialorder %v1543, 8.507059e+37
      %v1545 = vand.u32 %v1392, 2147483648
      %v1546 = vor.u32 1.1754944e-38, %v1545
      %v1547 = vsel %vm1544, %v1546, %v1542
      %v1548 = vmul.f32 1.0, %v1547
      %v1549 = vrcp.pop %v1393
      %v1550 = vmul.f32 %v1393, %v1549
      %v1551 = vsub.f32 1.0, %v1550
      %v1552 = vmul.f32 %v1549, %v1551
      %v1553 = vadd.f32 %v1549, %v1552
      %vm1554 = vweird.f32 %v1393
      %vm1555 = vweird.f32 %v1549
      %vm1556 = vmor %vm1554, %vm1555
      %v1557 = vsel %vm1556, %v1549, %v1553
      %v1558 = vand.u32 2147483647, %v1393
      %vm1559 = vcmp.eq.f32.partialorder %v1558, 8.507059e+37
      %v1560 = vand.u32 %v1393, 2147483648
      %v1561 = vor.u32 1.1754944e-38, %v1560
      %v1562 = vsel %vm1559, %v1561, %v1557
      %v1563 = vmul.f32 1.0, %v1562
      %v1564 = vrcp.pop %v1394
      %v1565 = vmul.f32 %v1394, %v1564
      %v1566 = vsub.f32 1.0, %v1565
      %v1567 = vmul.f32 %v1564, %v1566
      %v1568 = vadd.f32 %v1564, %v1567
      %vm1569 = vweird.f32 %v1394
      %vm1570 = vweird.f32 %v1564
      %vm1571 = vmor %vm1569, %vm1570
      %v1572 = vsel %vm1571, %v1564, %v1568
      %v1573 = vand.u32 2147483647, %v1394
      %vm1574 = vcmp.eq.f32.partialorder %v1573, 8.507059e+37
      %v1575 = vand.u32 %v1394, 2147483648
      %v1576 = vor.u32 1.1754944e-38, %v1575
      %v1577 = vsel %vm1574, %v1576, %v1572
      %v1578 = vmul.f32 1.0, %v1577
      %v1579 = vrcp.pop %v1395
      %v1580 = vmul.f32 %v1395, %v1579
      %v1581 = vsub.f32 1.0, %v1580
      %v1582 = vmul.f32 %v1579, %v1581
      %v1583 = vadd.f32 %v1579, %v1582
      %vm1584 = vweird.f32 %v1395
      %vm1585 = vweird.f32 %v1579
      %vm1586 = vmor %vm1584, %vm1585
      %v1587 = vsel %vm1586, %v1579, %v1583
      %v1588 = vand.u32 2147483647, %v1395
      %vm1589 = vcmp.eq.f32.partialorder %v1588, 8.507059e+37
      %v1590 = vand.u32 %v1395, 2147483648
      %v1591 = vor.u32 1.1754944e-38, %v1590
      %v1592 = vsel %vm1589, %v1591, %v1587
      %v1593 = vmul.f32 1.0, %v1592
      %v1594 = vrcp.pop %v1396
      %v1595 = vmul.f32 %v1396, %v1594
      %v1596 = vsub.f32 1.0, %v1595
      %v1597 = vmul.f32 %v1594, %v1596
      %v1598 = vadd.f32 %v1594, %v1597
      %vm1599 = vweird.f32 %v1396
      %vm1600 = vweird.f32 %v1594
      %vm1601 = vmor %vm1599, %vm1600
      %v1602 = vsel %vm1601, %v1594, %v1598
      %v1603 = vand.u32 2147483647, %v1396
      %vm1604 = vcmp.eq.f32.partialorder %v1603, 8.507059e+37
      %v1605 = vand.u32 %v1396, 2147483648
      %v1606 = vor.u32 1.1754944e-38, %v1605
      %v1607 = vsel %vm1604, %v1606, %v1602
      %v1608 = vmul.f32 1.0, %v1607
      %v1609 = vrcp.pop %v1397
      %v1610 = vmul.f32 %v1397, %v1609
      %v1611 = vsub.f32 1.0, %v1610
      %v1612 = vmul.f32 %v1609, %v1611
      %v1613 = vadd.f32 %v1609, %v1612
      %vm1614 = vweird.f32 %v1397
      %vm1615 = vweird.f32 %v1609
      %vm1616 = vmor %vm1614, %vm1615
      %v1617 = vsel %vm1616, %v1609, %v1613
      %v1618 = vand.u32 2147483647, %v1397
      %vm1619 = vcmp.eq.f32.partialorder %v1618, 8.507059e+37
      %v1620 = vand.u32 %v1397, 2147483648
      %v1621 = vor.u32 1.1754944e-38, %v1620
      %v1622 = vsel %vm1619, %v1621, %v1617
      %v1623 = vmul.f32 1.0, %v1622
      %v1624 = vrcp.pop %v1398
      %v1625 = vmul.f32 %v1398, %v1624
      %v1626 = vsub.f32 1.0, %v1625
      %v1627 = vmul.f32 %v1624, %v1626
      %v1628 = vadd.f32 %v1624, %v1627
      %vm1629 = vweird.f32 %v1398
      %vm1630 = vweird.f32 %v1624
      %vm1631 = vmor %vm1629, %vm1630
      %v1632 = vsel %vm1631, %v1624, %v1628
      %v1633 = vand.u32 2147483647, %v1398
      %vm1634 = vcmp.eq.f32.partialorder %v1633, 8.507059e+37
      %v1635 = vand.u32 %v1398, 2147483648
      %v1636 = vor.u32 1.1754944e-38, %v1635
      %v1637 = vsel %vm1634, %v1636, %v1632
      %v1638 = vmul.f32 1.0, %v1637
      %1640 = vset.pattern.permute.xlu0 0
      %1641 = vperm.xlu0 %1640, %v1413
      %v1642 = vpop.permute.xlu0 %1641
      %1645 = vset.pattern.permute.xlu0 0
      %1646 = vperm.xlu0 %1645, %v1428
      %v1647 = vpop.permute.xlu0 %1646
      %1650 = vset.pattern.permute.xlu0 0
      %1651 = vperm.xlu0 %1650, %v1443
      %v1652 = vpop.permute.xlu0 %1651
      %1655 = vset.pattern.permute.xlu0 0
      %1656 = vperm.xlu0 %1655, %v1458
      %v1657 = vpop.permute.xlu0 %1656
      %1660 = vset.pattern.permute.xlu0 0
      %1661 = vperm.xlu0 %1660, %v1473
      %v1662 = vpop.permute.xlu0 %1661
      %1665 = vset.pattern.permute.xlu0 0
      %1666 = vperm.xlu0 %1665, %v1488
      %v1667 = vpop.permute.xlu0 %1666
      %1670 = vset.pattern.permute.xlu0 0
      %1671 = vperm.xlu0 %1670, %v1503
      %v1672 = vpop.permute.xlu0 %1671
      %1675 = vset.pattern.permute.xlu0 0
      %1676 = vperm.xlu0 %1675, %v1518
      %v1677 = vpop.permute.xlu0 %1676
      %1680 = vset.pattern.permute.xlu0 0
      %1681 = vperm.xlu0 %1680, %v1533
      %v1682 = vpop.permute.xlu0 %1681
      %1685 = vset.pattern.permute.xlu0 0
      %1686 = vperm.xlu0 %1685, %v1548
      %v1687 = vpop.permute.xlu0 %1686
      %1690 = vset.pattern.permute.xlu0 0
      %1691 = vperm.xlu0 %1690, %v1563
      %v1692 = vpop.permute.xlu0 %1691
      %1695 = vset.pattern.permute.xlu0 0
      %1696 = vperm.xlu0 %1695, %v1578
      %v1697 = vpop.permute.xlu0 %1696
      %1700 = vset.pattern.permute.xlu0 0
      %1701 = vperm.xlu0 %1700, %v1593
      %v1702 = vpop.permute.xlu0 %1701
      %1705 = vset.pattern.permute.xlu0 0
      %1706 = vperm.xlu0 %1705, %v1608
      %v1707 = vpop.permute.xlu0 %1706
      %1710 = vset.pattern.permute.xlu0 0
      %1711 = vperm.xlu0 %1710, %v1623
      %v1712 = vpop.permute.xlu0 %1711
      %1715 = vset.pattern.permute.xlu0 0
      %1716 = vperm.xlu0 %1715, %v1638
      %v1717 = vpop.permute.xlu0 %1716
      %v1719 = vmul.f32 %v1642, %v1247
      %v1720 = vmul.f32 %v1647, %v1248
      %v1721 = vmul.f32 %v1652, %v1249
      %v1722 = vmul.f32 %v1657, %v1250
      %v1723 = vmul.f32 %v1662, %v1251
      %v1724 = vmul.f32 %v1667, %v1252
      %v1725 = vmul.f32 %v1672, %v1253
      %v1726 = vmul.f32 %v1677, %v1254
      %v1727 = vmul.f32 %v1682, %v1255
      %v1728 = vmul.f32 %v1687, %v1256
      %v1729 = vmul.f32 %v1692, %v1257
      %v1730 = vmul.f32 %v1697, %v1258
      %v1731 = vmul.f32 %v1702, %v1259
      %v1732 = vmul.f32 %v1707, %v1260
      %v1733 = vmul.f32 %v1712, %v1261
      %v1734 = vmul.f32 %v1717, %v1262
      %v1735 = vld [vmem:[#allocation2] sm:$0xff]
      %v1736 = vld [vmem:[#allocation2 + $0x8] sm:$0xff]
      %v1737 = vld [vmem:[#allocation2 + $0x10] sm:$0xff]
      %v1738 = vld [vmem:[#allocation2 + $0x18] sm:$0xff]
      %v1739 = vld [vmem:[#allocation2 + $0x20] sm:$0xff]
      %v1740 = vld [vmem:[#allocation2 + $0x28] sm:$0xff]
      %v1741 = vld [vmem:[#allocation2 + $0x30] sm:$0xff]
      %v1742 = vld [vmem:[#allocation2 + $0x38] sm:$0xff]
      %v1743 = vpack.c.bf16 %v1720, %v1719
      %v1744 = vpack.c.bf16 %v1722, %v1721
      %v1745 = vpack.c.bf16 %v1724, %v1723
      %v1746 = vpack.c.bf16 %v1726, %v1725
      %v1747 = vpack.c.bf16 %v1728, %v1727
      %v1748 = vpack.c.bf16 %v1730, %v1729
      %v1749 = vpack.c.bf16 %v1732, %v1731
      %v1750 = vpack.c.bf16 %v1734, %v1733
      %1751 = vmatpush.bf16.msra.mxu0 %v1750
      %1752 = vmatpush.bf16.msra.mxu0 %v1749
      %1753 = vmatpush.bf16.msra.mxu0 %v1748
      %1754 = vmatpush.bf16.msra.mxu0 %v1747
      %1755 = vmatpush.bf16.msra.mxu0 %v1746
      %1756 = vmatpush.bf16.msra.mxu0 %v1745
      %1757 = vmatpush.bf16.msra.mxu0 %v1744
      %1758 = vmatpush.bf16.msra.mxu0 %v1743
      %1759 = vmatmul.bf16.gmra.mxu0 %v601
      %v1760 = vpop.f32.mrf.mxu0
      %v1761 = vadd.f32 0.0, %v1760
      %v1762 = vpop.f32.mrf.mxu0
      %v1763 = vadd.f32 0.0, %v1762
      %1764 = vmatmul.bf16.gmra.mxu0 %v602
      %v1765 = vpop.f32.mrf.mxu0
      %v1766 = vadd.f32 0.0, %v1765
      %v1767 = vpop.f32.mrf.mxu0
      %v1768 = vadd.f32 0.0, %v1767
      %1769 = vmatmul.bf16.gmra.mxu0 %v603
      %v1770 = vpop.f32.mrf.mxu0
      %v1771 = vadd.f32 0.0, %v1770
      %v1772 = vpop.f32.mrf.mxu0
      %v1773 = vadd.f32 0.0, %v1772
      %1774 = vmatmul.bf16.gmra.mxu0 %v604
      %v1775 = vpop.f32.mrf.mxu0
      %v1776 = vadd.f32 0.0, %v1775
      %v1777 = vpop.f32.mrf.mxu0
      %v1778 = vadd.f32 0.0, %v1777
      %1779 = vdwg.mxu0
      %v1780 = vadd.f32 %v1735, %v1761
      %v1781 = vadd.f32 %v1736, %v1763
      %v1782 = vadd.f32 %v1737, %v1766
      %v1783 = vadd.f32 %v1738, %v1768
      %v1784 = vadd.f32 %v1739, %v1771
      %v1785 = vadd.f32 %v1740, %v1773
      %v1786 = vadd.f32 %v1741, %v1776
      %v1787 = vadd.f32 %v1742, %v1778
      %1788 = vst [vmem:[#allocation2] sm:$0xff] %v1780
      %1789 = vst [vmem:[#allocation2 + $0x8] sm:$0xff] %v1781
      %1790 = vst [vmem:[#allocation2 + $0x10] sm:$0xff] %v1782
      %1791 = vst [vmem:[#allocation2 + $0x18] sm:$0xff] %v1783
      %1792 = vst [vmem:[#allocation2 + $0x20] sm:$0xff] %v1784
      %1793 = vst [vmem:[#allocation2 + $0x28] sm:$0xff] %v1785
      %1794 = vst [vmem:[#allocation2 + $0x30] sm:$0xff] %v1786
      %1795 = vst [vmem:[#allocation2 + $0x38] sm:$0xff] %v1787
      %1796 = vst [vmem:[%s497] sm:$0xff] %v1247
      %1797 = vst [vmem:[%s497 + $0x8] sm:$0xff] %v1248
      %1798 = vst [vmem:[%s497 + $0x10] sm:$0xff] %v1249
      %1799 = vst [vmem:[%s497 + $0x18] sm:$0xff] %v1250
      %1800 = vst [vmem:[%s497 + $0x20] sm:$0xff] %v1251
      %1801 = vst [vmem:[%s497 + $0x28] sm:$0xff] %v1252
      %1802 = vst [vmem:[%s497 + $0x30] sm:$0xff] %v1253
      %1803 = vst [vmem:[%s497 + $0x38] sm:$0xff] %v1254
      %1804 = vst [vmem:[%s497 + $0x40] sm:$0xff] %v1255
      %1805 = vst [vmem:[%s497 + $0x48] sm:$0xff] %v1256
      %1806 = vst [vmem:[%s497 + $0x50] sm:$0xff] %v1257
      %1807 = vst [vmem:[%s497 + $0x58] sm:$0xff] %v1258
      %1808 = vst [vmem:[%s497 + $0x60] sm:$0xff] %v1259
      %1809 = vst [vmem:[%s497 + $0x68] sm:$0xff] %v1260
      %1810 = vst [vmem:[%s497 + $0x70] sm:$0xff] %v1261
      %1811 = vst [vmem:[%s497 + $0x78] sm:$0xff] %v1262
      %p1812 = scmp.eq.s32.totalorder %s28, 3
      // Predicated region
      $region77: #{atomgc_forward.1} parent=71 // pred_check
        %p1813 = pneg %p1812
      $region78: #{atomgc_forward.1} parent=71 // pred_check_branch
        %1815 = sbr.rel (%p1813) target = $region80
      $region79: #{atomgc_forward.1} parent=71 // pred_region
        %v1816 = vld [vmem:[%s10] sm:$0xf]
        %v1817 = vld [vmem:[%s10 + $0x4] sm:$0xf]
        %v1818 = vld [vmem:[%s10 + $0x8] sm:$0xf]
        %v1819 = vld [vmem:[%s10 + $0xc] sm:$0xf]
        %v1820 = vld [vmem:[%s10 + $0x10] sm:$0xf]
        %v1821 = vld [vmem:[%s10 + $0x14] sm:$0xf]
        %v1822 = vld [vmem:[%s10 + $0x18] sm:$0xf]
        %v1823 = vld [vmem:[%s10 + $0x1c] sm:$0xf]
        %v1824 = vld [vmem:[%s10 + $0x20] sm:$0xf]
        %v1825 = vld [vmem:[%s10 + $0x24] sm:$0xf]
        %v1826 = vld [vmem:[%s10 + $0x28] sm:$0xf]
        %v1827 = vld [vmem:[%s10 + $0x2c] sm:$0xf]
        %v1828 = vld [vmem:[%s10 + $0x30] sm:$0xf]
        %v1829 = vld [vmem:[%s10 + $0x34] sm:$0xf]
        %v1830 = vld [vmem:[%s10 + $0x38] sm:$0xf]
        %v1831 = vld [vmem:[%s10 + $0x3c] sm:$0xf]
        %v1832 = vld [vmem:[#allocation2] sm:$0xff]
        %v1833 = vld [vmem:[#allocation2 + $0x8] sm:$0xff]
        %v1834 = vld [vmem:[#allocation2 + $0x10] sm:$0xff]
        %v1835 = vld [vmem:[#allocation2 + $0x18] sm:$0xff]
        %v1836 = vld [vmem:[#allocation2 + $0x20] sm:$0xff]
        %v1837 = vld [vmem:[#allocation2 + $0x28] sm:$0xff]
        %v1838 = vld [vmem:[#allocation2 + $0x30] sm:$0xff]
        %v1839 = vld [vmem:[#allocation2 + $0x38] sm:$0xff]
        %v1840 = vpack.c.bf16 %v1833, %v1832
        %v1841 = vpack.c.bf16 %v1835, %v1834
        %v1842 = vpack.c.bf16 %v1837, %v1836
        %v1843 = vpack.c.bf16 %v1839, %v1838
        %v1844 = vld [vmem:[%s11] sm:$0xf]
        %v1845 = vld [vmem:[%s11 + $0x4] sm:$0xf]
        %v1846 = vld [vmem:[%s11 + $0x8] sm:$0xf]
        %v1847 = vld [vmem:[%s11 + $0xc] sm:$0xf]
        %v1848 = vld [vmem:[%s11 + $0x10] sm:$0xf]
        %v1849 = vld [vmem:[%s11 + $0x14] sm:$0xf]
        %v1850 = vld [vmem:[%s11 + $0x18] sm:$0xf]
        %v1851 = vld [vmem:[%s11 + $0x1c] sm:$0xf]
        %v1852 = vld [vmem:[%s11 + $0x20] sm:$0xf]
        %v1853 = vld [vmem:[%s11 + $0x24] sm:$0xf]
        %v1854 = vld [vmem:[%s11 + $0x28] sm:$0xf]
        %v1855 = vld [vmem:[%s11 + $0x2c] sm:$0xf]
        %v1856 = vld [vmem:[%s11 + $0x30] sm:$0xf]
        %v1857 = vld [vmem:[%s11 + $0x34] sm:$0xf]
        %v1858 = vld [vmem:[%s11 + $0x38] sm:$0xf]
        %v1859 = vld [vmem:[%s11 + $0x3c] sm:$0xf]
        %v1876 = vunpack.c.l.b16 %v1844
        %v1877 = vunpack.c.l.b16 %v1845
        %v1878 = vunpack.c.l.b16 %v1846
        %v1879 = vunpack.c.l.b16 %v1847
        %v1880 = vunpack.c.l.b16 %v1848
        %v1881 = vunpack.c.l.b16 %v1849
        %v1882 = vunpack.c.l.b16 %v1850
        %v1883 = vunpack.c.l.b16 %v1851
        %v1884 = vunpack.c.l.b16 %v1852
        %v1885 = vunpack.c.l.b16 %v1853
        %v1886 = vunpack.c.l.b16 %v1854
        %v1887 = vunpack.c.l.b16 %v1855
        %v1888 = vunpack.c.l.b16 %v1856
        %v1889 = vunpack.c.l.b16 %v1857
        %v1890 = vunpack.c.l.b16 %v1858
        %v1891 = vunpack.c.l.b16 %v1859
        %v1892 = vpack.c.b16 %v1877, %v1876
        %v1893 = vpack.c.b16 %v1879, %v1878
        %v1894 = vpack.c.b16 %v1881, %v1880
        %v1895 = vpack.c.b16 %v1883, %v1882
        %v1896 = vpack.c.b16 %v1885, %v1884
        %v1897 = vpack.c.b16 %v1887, %v1886
        %v1898 = vpack.c.b16 %v1889, %v1888
        %v1899 = vpack.c.b16 %v1891, %v1890
        %1908 = vmatpush.bf16.msra.mxu0 %v1899
        %1909 = vmatpush.bf16.msra.mxu0 %v1898
        %1910 = vmatpush.bf16.msra.mxu0 %v1897
        %1911 = vmatpush.bf16.msra.mxu0 %v1896
        %1912 = vmatpush.bf16.msra.mxu0 %v1895
        %1913 = vmatpush.bf16.msra.mxu0 %v1894
        %1914 = vmatpush.bf16.msra.mxu0 %v1893
        %1915 = vmatpush.bf16.msra.mxu0 %v1892
        %1916 = vmatmul.bf16.gmra.mxu0 %v1840
        %v1917 = vpop.f32.mrf.mxu0
        %v1918 = vadd.f32 0.0, %v1917
        %v1919 = vpop.f32.mrf.mxu0
        %v1920 = vadd.f32 0.0, %v1919
        %1921 = vmatmul.bf16.gmra.mxu0 %v1841
        %v1922 = vpop.f32.mrf.mxu0
        %v1923 = vadd.f32 0.0, %v1922
        %v1924 = vpop.f32.mrf.mxu0
        %v1925 = vadd.f32 0.0, %v1924
        %1926 = vmatmul.bf16.gmra.mxu0 %v1842
        %v1927 = vpop.f32.mrf.mxu0
        %v1928 = vadd.f32 0.0, %v1927
        %v1929 = vpop.f32.mrf.mxu0
        %v1930 = vadd.f32 0.0, %v1929
        %1931 = vmatmul.bf16.gmra.mxu0 %v1843
        %v1932 = vpop.f32.mrf.mxu0
        %v1933 = vadd.f32 0.0, %v1932
        %v1934 = vpop.f32.mrf.mxu0
        %v1935 = vadd.f32 0.0, %v1934
        %1936 = vdwg.mxu0
        %v1953 = vunpack.c.l.b16 %v1816
        %v1954 = vunpack.c.l.b16 %v1817
        %v1955 = vunpack.c.l.b16 %v1818
        %v1956 = vunpack.c.l.b16 %v1819
        %v1957 = vunpack.c.l.b16 %v1820
        %v1958 = vunpack.c.l.b16 %v1821
        %v1959 = vunpack.c.l.b16 %v1822
        %v1960 = vunpack.c.l.b16 %v1823
        %v1961 = vunpack.c.l.b16 %v1824
        %v1962 = vunpack.c.l.b16 %v1825
        %v1963 = vunpack.c.l.b16 %v1826
        %v1964 = vunpack.c.l.b16 %v1827
        %v1965 = vunpack.c.l.b16 %v1828
        %v1966 = vunpack.c.l.b16 %v1829
        %v1967 = vunpack.c.l.b16 %v1830
        %v1968 = vunpack.c.l.b16 %v1831
        %v1969 = vpack.c.b16 %v1954, %v1953
        %v1970 = vpack.c.b16 %v1956, %v1955
        %v1971 = vpack.c.b16 %v1958, %v1957
        %v1972 = vpack.c.b16 %v1960, %v1959
        %v1973 = vpack.c.b16 %v1962, %v1961
        %v1974 = vpack.c.b16 %v1964, %v1963
        %v1975 = vpack.c.b16 %v1966, %v1965
        %v1976 = vpack.c.b16 %v1968, %v1967
        %1985 = vmatpush.bf16.msra.mxu0 %v1976
        %1986 = vmatpush.bf16.msra.mxu0 %v1975
        %1987 = vmatpush.bf16.msra.mxu0 %v1974
        %1988 = vmatpush.bf16.msra.mxu0 %v1973
        %1989 = vmatpush.bf16.msra.mxu0 %v1972
        %1990 = vmatpush.bf16.msra.mxu0 %v1971
        %1991 = vmatpush.bf16.msra.mxu0 %v1970
        %1992 = vmatpush.bf16.msra.mxu0 %v1969
        %1993 = vmatmul.bf16.gmra.mxu0 %v637
        %v1994 = vpop.f32.mrf.mxu0
        %v1995 = vadd.f32 %v1918, %v1994
        %v1996 = vpop.f32.mrf.mxu0
        %v1997 = vadd.f32 %v1920, %v1996
        %1998 = vmatmul.bf16.gmra.mxu0 %v638
        %v1999 = vpop.f32.mrf.mxu0
        %v2000 = vadd.f32 %v1923, %v1999
        %v2001 = vpop.f32.mrf.mxu0
        %v2002 = vadd.f32 %v1925, %v2001
        %2003 = vmatmul.bf16.gmra.mxu0 %v639
        %v2004 = vpop.f32.mrf.mxu0
        %v2005 = vadd.f32 %v1928, %v2004
        %v2006 = vpop.f32.mrf.mxu0
        %v2007 = vadd.f32 %v1930, %v2006
        %2008 = vmatmul.bf16.gmra.mxu0 %v640
        %v2009 = vpop.f32.mrf.mxu0
        %v2010 = vadd.f32 %v1933, %v2009
        %v2011 = vpop.f32.mrf.mxu0
        %v2012 = vadd.f32 %v1935, %v2011
        %2013 = vdwg.mxu0
        %v2014 = vld [vmem:[%s12] sm:$0x1]
        %v2016 = vperm.slane %v2014, 0
        %v2018 = vadd.f32 %v1995, %v2016
        %v2019 = vadd.f32 %v1997, %v2016
        %v2020 = vadd.f32 %v2000, %v2016
        %v2021 = vadd.f32 %v2002, %v2016
        %v2022 = vadd.f32 %v2005, %v2016
        %v2023 = vadd.f32 %v2007, %v2016
        %v2024 = vadd.f32 %v2010, %v2016
        %v2025 = vadd.f32 %v2012, %v2016
        %v2026 = vmax.f32 %v2018, 0.0
        %v2027 = vmax.f32 %v2019, 0.0
        %v2028 = vmax.f32 %v2020, 0.0
        %v2029 = vmax.f32 %v2021, 0.0
        %v2030 = vmax.f32 %v2022, 0.0
        %v2031 = vmax.f32 %v2023, 0.0
        %v2032 = vmax.f32 %v2024, 0.0
        %v2033 = vmax.f32 %v2025, 0.0
        %2034 = vst [vmem:[%s13] sm:$0xff] %v2026
        %2035 = vst [vmem:[%s13 + $0x8] sm:$0xff] %v2027
        %2036 = vst [vmem:[%s13 + $0x10] sm:$0xff] %v2028
        %2037 = vst [vmem:[%s13 + $0x18] sm:$0xff] %v2029
        %2038 = vst [vmem:[%s13 + $0x20] sm:$0xff] %v2030
        %2039 = vst [vmem:[%s13 + $0x28] sm:$0xff] %v2031
        %2040 = vst [vmem:[%s13 + $0x30] sm:$0xff] %v2032
        %2041 = vst [vmem:[%s13 + $0x38] sm:$0xff] %v2033
      $region80: #{atomgc_forward.1} parent=71 // pred_fallthru
        _
      %s2042 = smul.u32 16, %s28
      %p2043 = scmp.lt.s32.totalorder %s2042, 63
      %s2044 = scalar_select %p2043, %s2042, 63
      %s2045 = smul.addr %s2044, 8
      %s2046 = scalar_lea.vmem %s14, %s2045
      // Predicated region
      $region81: #{atomgc_forward.1} parent=71 // pred_check
        %p2047 = pneg %p329
      $region82: #{atomgc_forward.1} parent=71 // pred_check_branch
        %2049 = sbr.rel (%p2047) target = $region84
      $region83: #{atomgc_forward.1} parent=71 // pred_region
        _
      $region84: #{atomgc_forward.1} parent=71 // pred_fallthru
        _
      // Predicated region
      $region85: #{atomgc_forward.1} parent=71 // pred_check
        %p2050 = pneg %p355
      $region86: #{atomgc_forward.1} parent=71 // pred_check_branch
        %2052 = sbr.rel (%p2050) target = $region88
      $region87: #{atomgc_forward.1} parent=71 // pred_region
        %s2053 = smul.u32 16, %s28
      $region88: #{atomgc_forward.1} parent=71 // pred_fallthru
        _
      // Predicated region
      $region89: #{atomgc_forward.1} parent=71 // pred_check
        %p2054 = pneg %p329
      $region90: #{atomgc_forward.1} parent=71 // pred_check_branch
        %2056 = sbr.rel (%p2054) target = $region92
      $region91: #{atomgc_forward.1} parent=71 // pred_region
        _
      $region92: #{atomgc_forward.1} parent=71 // pred_fallthru
        _
    $region72: #{atomgc_forward.1} parent=5 // pred_fallthru
      _
    %p2057 = scmp.le.s32.totalorder 2, %s23
    // Predicated region
    $region93: #{atomgc_forward.1} parent=5 // pred_check
      %p2058 = pneg %p2057
    $region94: #{atomgc_forward.1} parent=5 // pred_check_branch
      %2060 = sbr.rel (%p2058) target = $region96
    $region95: #{atomgc_forward.1} parent=5 // pred_region
      %s2061 = ssub.s32 %s23, 2
      // Predicated region
      $region97: #{atomgc_forward.1} parent=95 // pred_check
        %p2062 = pneg %p361
      $region98: #{atomgc_forward.1} parent=95 // pred_check_branch
        %2064 = sbr.rel (%p2062) target = $region100
      $region99: #{atomgc_forward.1} parent=95 // pred_region
        %s2065 = smul.u32 16, %s29
        %p2066 = scmp.lt.s32.totalorder %s2065, 63
        %s2067 = scalar_select %p2066, %s2065, 63
        %s2068 = smul.addr %s2067, 8
        %s2069 = scalar_lea.vmem %s14, %s2068
      $region100: #{atomgc_forward.1} parent=95 // pred_fallthru
        _
    $region96: #{atomgc_forward.1} parent=5 // pred_fallthru
      _
  $region6: #{atomgc_forward.1} parent=0 // loop_footer
    %s27 = sadd.s32 1, %s23
  $region7: #{atomgc_forward.1} parent=0 // loop_footer_branch
    %22 = sbr.rel target = $region3
  $region8: #{atomgc_forward.1} parent=0 // loop_exit
    _

</llo_original>
